<compile_context>
chip_gen: v6e
topology: v6e:2x2x1
jax: 0.10.0
libtpu: 0.0.40
codegen_flags: <defaults>
</compile_context>

<pallas_src>
import functools

import jax
import jax.numpy as jnp
from jax.experimental import pallas as pl
from jax.experimental.pallas import tpu as pltpu


def _round_up(n: int, m: int) -> int:
    return ((n + m - 1) // m) * m


def _cdiv(a: int, b: int) -> int:
    return (a + b - 1) // b


def _vmem_capacity_bytes() -> int:
    try:
        return int(pltpu.get_tpu_info().vmem_capacity_bytes)
    except Exception:  # conservative fallback (v7x-sized)
        return 64 << 20


def _nbytes(shape, dtype) -> int:
    n = 1
    for d in shape:
        n *= int(d)
    return n * jnp.dtype(dtype).itemsize


def _mlp_kernel(x_ref, w1_ref, b1_ref, w2_ref, b2_ref, w3_ref, b3_ref,
                o_ref, h1_ref, acc_ref):
    """Grid: (batch tile i [parallel], H chunk j [arbitrary])."""
    j = pl.program_id(1)

    @pl.when(j == 0)
    def _init():
        # Layer 1 once per batch tile; keep h1 resident (bf16) for all H chunks.
        h1 = jnp.dot(x_ref[...], w1_ref[...],
                     preferred_element_type=jnp.float32)
        h1 = jnp.maximum(h1 + b1_ref[...], 0.0)
        h1_ref[...] = h1.astype(h1_ref.dtype)
        acc_ref[...] = jnp.zeros_like(acc_ref)

    # Layer 2 chunk: (TB, TH) slab of relu(h1 @ w2 + b2), f32 accumulation.
    h2 = jnp.dot(h1_ref[...], w2_ref[...], preferred_element_type=jnp.float32)
    h2 = jnp.maximum(h2 + b2_ref[...], 0.0)
    # Layer 3 partial: fold the slab into the (TB, C_pad) f32 accumulator.
    acc_ref[...] += jnp.dot(h2.astype(w3_ref.dtype), w3_ref[...],
                            preferred_element_type=jnp.float32)

    @pl.when(j == pl.num_programs(1) - 1)
    def _finalize():
        o_ref[...] = acc_ref[...] + b3_ref[...]


@functools.partial(jax.jit, static_argnames=("tb", "th"))
def expandable_fc_relu_cifar10(x, params, *, tb: int = 512, th: int = 512):
    """Forward pass of ExpandableFcReLu_cifar10.

    x:      (B, 3, 32, 32) float32, NCHW (flattened like torch.flatten(x, 1))
    params: dict with w1 (3072, E), b1 (1, E), w2 (E, 5E), b2 (1, 5E),
            w3 (5E, C), b3 (1, C)   -- weights stored (in, out), i.e. W.T of torch.
    returns (B, C) float32 logits
    """
    B = x.shape[0]
    x_flat = x.reshape(B, -1)                 # same glue as torch.flatten(x, 1)
    K = x_flat.shape[1]

    w1, b1 = params["w1"], params["b1"]
    w2, b2 = params["w2"], params["b2"]
    w3, b3 = params["w3"], params["b3"]
    E, H, C = w1.shape[1], w2.shape[1], w3.shape[1]

    mat_dtype = jnp.bfloat16      # MXU-native matmul inputs
    acc_dtype = jnp.float32       # accumulation / biases / output

    # Lane-pad N dims to 128; H additionally padded to a multiple of TH so it
    # chunks evenly (zeros are ReLU/matmul-neutral).
    E_pad = _round_up(E, 128)
    C_pad = _round_up(C, 128)
    TH = min(th, _round_up(H, 128))
    H_pad = _round_up(H, TH)
    n_h = H_pad // TH

    # Batch tiling: sublane-multiple, capped at tb, and >=2 tiles when B >= 16
    # so both v7x TensorCores get work along the "parallel" axis.
    TB = min(tb, _round_up(B, 8))
    if B >= 16 and _cdiv(B, TB) < 2:
        TB = _round_up(_cdiv(B, 2), 8)
    B_pad = _round_up(B, TB)
    n_b = B_pad // TB

    x_p = jnp.pad(x_flat, ((0, B_pad - B), (0, 0))).astype(mat_dtype)
    w1p = jnp.pad(w1, ((0, 0), (0, E_pad - E))).astype(mat_dtype)
    b1p = jnp.pad(b1, ((0, 0), (0, E_pad - E))).astype(acc_dtype)
    w2p = jnp.pad(w2, ((0, E_pad - E), (0, H_pad - H))).astype(mat_dtype)
    b2p = jnp.pad(b2, ((0, 0), (0, H_pad - H))).astype(acc_dtype)
    w3p = jnp.pad(w3, ((0, H_pad - H), (0, C_pad - C))).astype(mat_dtype)
    b3p = jnp.pad(b3, ((0, 0), (0, C_pad - C))).astype(acc_dtype)

    # Resident across the whole grid (constant index_map): one VMEM buffer.
    def _resident(shape):
        return pl.BlockSpec(shape, lambda i, j: (0, 0),
                            pipeline_mode=pl.Buffered(1))

    in_specs = [
        pl.BlockSpec((TB, K), lambda i, j: (i, 0)),        # x tile (streamed)
        _resident((K, E_pad)),                             # w1
        _resident((1, E_pad)),                             # b1
        pl.BlockSpec((E_pad, TH), lambda i, j: (0, j)),    # w2 chunk (streamed)
        pl.BlockSpec((1, TH), lambda i, j: (0, j)),        # b2 chunk
        pl.BlockSpec((TH, C_pad), lambda i, j: (j, 0)),    # w3 chunk (streamed)
        _resident((1, C_pad)),                             # b3
    ]
    out_spec = pl.BlockSpec((TB, C_pad), lambda i, j: (i, 0))

    scratch_shapes = [
        pltpu.VMEM((TB, E_pad), mat_dtype),   # h1 (resident across H chunks)
        pltpu.VMEM((TB, C_pad), acc_dtype),   # layer-3 accumulator
    ]

    # Generation-aware VMEM budget with actual buffer multiplicities.
    vmem_need = (
        2 * _nbytes((TB, K), mat_dtype)            # x, double-buffered
        + 1 * _nbytes((K, E_pad), mat_dtype)       # w1, single-buffered
        + 1 * _nbytes((1, E_pad), acc_dtype)       # b1
        + 2 * _nbytes((E_pad, TH), mat_dtype)      # w2 chunk
        + 2 * _nbytes((1, TH), acc_dtype)          # b2 chunk
        + 2 * _nbytes((TH, C_pad), mat_dtype)      # w3 chunk
        + 1 * _nbytes((1, C_pad), acc_dtype)       # b3
        + 2 * _nbytes((TB, C_pad), acc_dtype)      # out, double-buffered
        + _nbytes((TB, E_pad), mat_dtype)          # h1 scratch
        + _nbytes((TB, C_pad), acc_dtype)          # acc scratch
    )
    headroom = 6 << 20                             # compiler internal scratch
    vmem_limit = max(16 << 20,
                     min(vmem_need + headroom,
                         int(0.85 * _vmem_capacity_bytes())))

    flops = 2 * B_pad * (K * E_pad + E_pad * H_pad + H_pad * C_pad)
    bytes_accessed = int(
        _nbytes((B_pad, K), mat_dtype)
        + _nbytes((K, E_pad), mat_dtype) + _nbytes((E_pad, H_pad), mat_dtype)
        + _nbytes((H_pad, C_pad), mat_dtype)
        + _nbytes((1, E_pad), acc_dtype) + _nbytes((1, H_pad), acc_dtype)
        + _nbytes((1, C_pad), acc_dtype)
        + _nbytes((B_pad, C_pad), acc_dtype)
    )

    out_padded = pl.pallas_call(
        _mlp_kernel,
        out_shape=jax.ShapeDtypeStruct((B_pad, C_pad), acc_dtype),
        grid=(n_b, n_h),
        in_specs=in_specs,
        out_specs=out_spec,
        scratch_shapes=scratch_shapes,
        compiler_params=pltpu.CompilerParams(
            dimension_semantics=("parallel", "arbitrary"),
            vmem_limit_bytes=vmem_limit,
        ),
        cost_estimate=pl.CostEstimate(
            flops=flops, transcendentals=0, bytes_accessed=bytes_accessed
        ),
    )(x_p, w1p, b1p, w2p, b2p, w3p, b3p)

    return out_padded[:B, :C]


def init_params(expansion: int, out_classes: int = 10, seed: int = 0):
    """Deterministic synthetic parameters (shapes match nn.Linear in the module)."""
    channels = 3
    inp_img_size = 1024
    in_dim = channels * inp_img_size  # 3072
    hid = 5 * expansion
    keys = jax.random.split(jax.random.PRNGKey(seed), 6)
    scale1 = 1.0 / jnp.sqrt(in_dim)
    scale2 = 1.0 / jnp.sqrt(expansion)
    scale3 = 1.0 / jnp.sqrt(hid)
    return {
        "w1": jax.random.uniform(keys[0], (in_dim, expansion), jnp.float32, -scale1, scale1),
        "b1": jax.random.uniform(keys[1], (1, expansion), jnp.float32, -scale1, scale1),
        "w2": jax.random.uniform(keys[2], (expansion, hid), jnp.float32, -scale2, scale2),
        "b2": jax.random.uniform(keys[3], (1, hid), jnp.float32, -scale2, scale2),
        "w3": jax.random.uniform(keys[4], (hid, out_classes), jnp.float32, -scale3, scale3),
        "b3": jax.random.uniform(keys[5], (1, out_classes), jnp.float32, -scale3, scale3),
    }


def _reference_f32(x, params):
    """Module semantics in pure f32 (loose check: bf16 matmul inputs in kernel)."""
    x = x.reshape(x.shape[0], -1)
    h1 = jnp.maximum(x @ params["w1"] + params["b1"], 0.0)
    h2 = jnp.maximum(h1 @ params["w2"] + params["b2"], 0.0)
    return h2 @ params["w3"] + params["b3"]


def _reference_mixed(x, params):
    """Same mixed precision as the kernel: bf16 matmul inputs, f32 accumulate."""
    bf = jnp.bfloat16
    xf = x.reshape(x.shape[0], -1).astype(bf)
    h1 = jnp.dot(xf, params["w1"].astype(bf), preferred_element_type=jnp.float32)
    h1 = jnp.maximum(h1 + params["b1"], 0.0).astype(bf)
    h2 = jnp.dot(h1, params["w2"].astype(bf), preferred_element_type=jnp.float32)
    h2 = jnp.maximum(h2 + params["b2"], 0.0).astype(bf)
    return (jnp.dot(h2, params["w3"].astype(bf), preferred_element_type=jnp.float32)
            + params["b3"])


if __name__ == "__main__":
    expansion = 32
    out_classes = 10
    batch = 2

    params = init_params(expansion, out_classes, seed=0)
    x = jax.random.normal(jax.random.PRNGKey(0), (batch, 3, 32, 32), jnp.float32)

    out = expandable_fc_relu_cifar10(x, params)
    out = jax.block_until_ready(out)
    assert out.shape == (batch, out_classes)

    # Tight check against a precision-matched (bf16-input / f32-accum) reference,
    # loose check against the pure-f32 module semantics.
    ref_mixed = _reference_mixed(x, params)
    ref_f32 = _reference_f32(x, params)
    assert jnp.allclose(out, ref_mixed, atol=2e-3, rtol=2e-3), "mismatch vs mixed ref"
    assert jnp.allclose(out, ref_f32, atol=5e-2, rtol=5e-2), "mismatch vs f32 ref"

    print("KERNEL_OK")
</pallas_src>

<mosaic_0001>
module attributes {stable_mosaic.version = 11 : i64} {
  func.func @_mlp_kernel(%arg0: i32, %arg1: i32, %arg2: memref<8x3072xbf16, #tpu.memory_space<vmem>>, %arg3: memref<3072x128xbf16, #tpu.memory_space<vmem>>, %arg4: memref<1x128xf32, #tpu.memory_space<vmem>>, %arg5: memref<128x256xbf16, #tpu.memory_space<vmem>>, %arg6: memref<1x256xf32, #tpu.memory_space<vmem>>, %arg7: memref<256x128xbf16, #tpu.memory_space<vmem>>, %arg8: memref<1x128xf32, #tpu.memory_space<vmem>>, %arg9: memref<8x128xf32, #tpu.memory_space<vmem>>, %arg10: memref<8x128xbf16, #tpu.memory_space<vmem>>, %arg11: memref<8x128xf32, #tpu.memory_space<vmem>>) attributes {dimension_semantics = [#tpu.dimension_semantics<parallel>, #tpu.dimension_semantics<arbitrary>], iteration_bounds = array<i64: 1, 1>, scalar_prefetch = 0 : i64, scratch_operands = 2 : i64, tpu.core_type = #tpu.core_type<tc>, window_params = [{transform_indices = @transform_0, window_bounds = array<i64: 8, 3072>}, {pipeline_mode = #tpu.pipeline_mode<synchronous>, transform_indices = @transform_1, window_bounds = array<i64: 3072, 128>}, {pipeline_mode = #tpu.pipeline_mode<synchronous>, transform_indices = @transform_2, window_bounds = array<i64: 1, 128>}, {transform_indices = @transform_3, window_bounds = array<i64: 128, 256>}, {transform_indices = @transform_4, window_bounds = array<i64: 1, 256>}, {transform_indices = @transform_5, window_bounds = array<i64: 256, 128>}, {pipeline_mode = #tpu.pipeline_mode<synchronous>, transform_indices = @transform_6, window_bounds = array<i64: 1, 128>}, {transform_indices = @transform_7, window_bounds = array<i64: 8, 128>}]} {
    %c0_i32 = arith.constant 0 : i32
    %0 = arith.cmpi eq, %arg1, %c0_i32 : i32
    %1 = arith.extui %0 : i1 to i32
    %c0_i32_0 = arith.constant 0 : i32
    %2 = arith.cmpi ne, %1, %c0_i32_0 : i32
    scf.if %2 {
      %c0_16 = arith.constant 0 : index
      %c0_17 = arith.constant 0 : index
      %20 = vector.load %arg2[%c0_16, %c0_17] : memref<8x3072xbf16, #tpu.memory_space<vmem>>, vector<8x3072xbf16>
      %c0_18 = arith.constant 0 : index
      %c0_19 = arith.constant 0 : index
      %21 = vector.load %arg3[%c0_18, %c0_19] : memref<3072x128xbf16, #tpu.memory_space<vmem>>, vector<3072x128xbf16>
      %cst_20 = arith.constant dense<0.000000e+00> : vector<8x128xf32>
      %22 = tpu.matmul %20, %21, %cst_20 {dimension_numbers = #tpu.dot_dimension_numbers<[1], [0], [0], [1], [0, 0, 1, 1], [], []>} : vector<8x3072xbf16>, vector<3072x128xbf16>, vector<8x128xf32> -> vector<8x128xf32>
      %c0_21 = arith.constant 0 : index
      %c0_22 = arith.constant 0 : index
      %23 = vector.load %arg4[%c0_21, %c0_22] : memref<1x128xf32, #tpu.memory_space<vmem>>, vector<1x128xf32>
      %24 = vector.broadcast %23 : vector<1x128xf32> to vector<8x128xf32>
      %25 = arith.addf %22, %24 : vector<8x128xf32>
      %cst_23 = arith.constant 0.000000e+00 : f32
      %26 = vector.broadcast %cst_23 : f32 to vector<8x128xf32>
      %27 = arith.maximumf %25, %26 : vector<8x128xf32>
      %28 = arith.truncf %27 : vector<8x128xf32> to vector<8x128xbf16>
      %c0_24 = arith.constant 0 : index
      %c0_25 = arith.constant 0 : index
      %29 = vector.load %arg10[%c0_24, %c0_25] : memref<8x128xbf16, #tpu.memory_space<vmem>>, vector<8x128xbf16>
      tpu.vector_store %arg10[%c0_24, %c0_25], %28 {strides = array<i32>} : memref<8x128xbf16, #tpu.memory_space<vmem>>, vector<8x128xbf16>,
      %cst_26 = arith.constant 0.000000e+00 : f32
      %30 = vector.broadcast %cst_26 : f32 to vector<8x128xf32>
      %c0_27 = arith.constant 0 : index
      %c0_28 = arith.constant 0 : index
      %31 = vector.load %arg11[%c0_27, %c0_28] : memref<8x128xf32, #tpu.memory_space<vmem>>, vector<8x128xf32>
      tpu.vector_store %arg11[%c0_27, %c0_28], %30 {strides = array<i32>} : memref<8x128xf32, #tpu.memory_space<vmem>>, vector<8x128xf32>,
    } else {
    }
    %c0 = arith.constant 0 : index
    %c0_1 = arith.constant 0 : index
    %3 = vector.load %arg10[%c0, %c0_1] : memref<8x128xbf16, #tpu.memory_space<vmem>>, vector<8x128xbf16>
    %c0_2 = arith.constant 0 : index
    %c0_3 = arith.constant 0 : index
    %4 = vector.load %arg5[%c0_2, %c0_3] : memref<128x256xbf16, #tpu.memory_space<vmem>>, vector<128x256xbf16>
    %cst = arith.constant dense<0.000000e+00> : vector<8x256xf32>
    %5 = tpu.matmul %3, %4, %cst {dimension_numbers = #tpu.dot_dimension_numbers<[1], [0], [0], [1], [0, 0, 1, 1], [], []>} : vector<8x128xbf16>, vector<128x256xbf16>, vector<8x256xf32> -> vector<8x256xf32>
    %c0_4 = arith.constant 0 : index
    %c0_5 = arith.constant 0 : index
    %6 = vector.load %arg6[%c0_4, %c0_5] : memref<1x256xf32, #tpu.memory_space<vmem>>, vector<1x256xf32>
    %7 = vector.broadcast %6 : vector<1x256xf32> to vector<8x256xf32>
    %8 = arith.addf %5, %7 : vector<8x256xf32>
    %cst_6 = arith.constant 0.000000e+00 : f32
    %9 = vector.broadcast %cst_6 : f32 to vector<8x256xf32>
    %10 = arith.maximumf %8, %9 : vector<8x256xf32>
    %c0_7 = arith.constant 0 : index
    %c0_8 = arith.constant 0 : index
    %11 = vector.load %arg11[%c0_7, %c0_8] : memref<8x128xf32, #tpu.memory_space<vmem>>, vector<8x128xf32>
    %12 = arith.truncf %10 : vector<8x256xf32> to vector<8x256xbf16>
    %c0_9 = arith.constant 0 : index
    %c0_10 = arith.constant 0 : index
    %13 = vector.load %arg7[%c0_9, %c0_10] : memref<256x128xbf16, #tpu.memory_space<vmem>>, vector<256x128xbf16>
    %cst_11 = arith.constant dense<0.000000e+00> : vector<8x128xf32>
    %14 = tpu.matmul %12, %13, %cst_11 {dimension_numbers = #tpu.dot_dimension_numbers<[1], [0], [0], [1], [0, 0, 1, 1], [], []>} : vector<8x256xbf16>, vector<256x128xbf16>, vector<8x128xf32> -> vector<8x128xf32>
    %15 = arith.addf %11, %14 : vector<8x128xf32>
    %c0_12 = arith.constant 0 : index
    %c0_13 = arith.constant 0 : index
    %16 = vector.load %arg11[%c0_12, %c0_13] : memref<8x128xf32, #tpu.memory_space<vmem>>, vector<8x128xf32>
    tpu.vector_store %arg11[%c0_12, %c0_13], %15 {strides = array<i32>} : memref<8x128xf32, #tpu.memory_space<vmem>>, vector<8x128xf32>,
    %c0_i32_14 = arith.constant 0 : i32
    %17 = arith.cmpi eq, %arg1, %c0_i32_14 : i32
    %18 = arith.extui %17 : i1 to i32
    %c0_i32_15 = arith.constant 0 : i32
    %19 = arith.cmpi ne, %18, %c0_i32_15 : i32
    scf.if %19 {
      %c0_16 = arith.constant 0 : index
      %c0_17 = arith.constant 0 : index
      %20 = vector.load %arg11[%c0_16, %c0_17] : memref<8x128xf32, #tpu.memory_space<vmem>>, vector<8x128xf32>
      %c0_18 = arith.constant 0 : index
      %c0_19 = arith.constant 0 : index
      %21 = vector.load %arg8[%c0_18, %c0_19] : memref<1x128xf32, #tpu.memory_space<vmem>>, vector<1x128xf32>
      %22 = vector.broadcast %21 : vector<1x128xf32> to vector<8x128xf32>
      %23 = arith.addf %20, %22 : vector<8x128xf32>
      %c0_20 = arith.constant 0 : index
      %c0_21 = arith.constant 0 : index
      %24 = vector.load %arg9[%c0_20, %c0_21] : memref<8x128xf32, #tpu.memory_space<vmem>>, vector<8x128xf32>
      tpu.vector_store %arg9[%c0_20, %c0_21], %23 {strides = array<i32>} : memref<8x128xf32, #tpu.memory_space<vmem>>, vector<8x128xf32>,
    } else {
    }
    return
  }
  func.func @transform_0(%arg0: i32, %arg1: i32) -> (i32, i32) {
    %c0_i32 = arith.constant 0 : i32
    %c0_i32_0 = arith.constant 0 : i32
    return %arg0, %c0_i32 : i32, i32
  }
  func.func @transform_1(%arg0: i32, %arg1: i32) -> (i32, i32) {
    %c0_i32 = arith.constant 0 : i32
    %c0_i32_0 = arith.constant 0 : i32
    %c0_i32_1 = arith.constant 0 : i32
    return %c0_i32, %c0_i32_0 : i32, i32
  }
  func.func @transform_2(%arg0: i32, %arg1: i32) -> (i32, i32) {
    %c0_i32 = arith.constant 0 : i32
    %c0_i32_0 = arith.constant 0 : i32
    %c0_i32_1 = arith.constant 0 : i32
    return %c0_i32, %c0_i32_0 : i32, i32
  }
  func.func @transform_3(%arg0: i32, %arg1: i32) -> (i32, i32) {
    %c0_i32 = arith.constant 0 : i32
    %c0_i32_0 = arith.constant 0 : i32
    return %c0_i32, %arg1 : i32, i32
  }
  func.func @transform_4(%arg0: i32, %arg1: i32) -> (i32, i32) {
    %c0_i32 = arith.constant 0 : i32
    %c0_i32_0 = arith.constant 0 : i32
    return %c0_i32, %arg1 : i32, i32
  }
  func.func @transform_5(%arg0: i32, %arg1: i32) -> (i32, i32) {
    %c0_i32 = arith.constant 0 : i32
    %c0_i32_0 = arith.constant 0 : i32
    return %arg1, %c0_i32 : i32, i32
  }
  func.func @transform_6(%arg0: i32, %arg1: i32) -> (i32, i32) {
    %c0_i32 = arith.constant 0 : i32
    %c0_i32_0 = arith.constant 0 : i32
    %c0_i32_1 = arith.constant 0 : i32
    return %c0_i32, %c0_i32_0 : i32, i32
  }
  func.func @transform_7(%arg0: i32, %arg1: i32) -> (i32, i32) {
    %c0_i32 = arith.constant 0 : i32
    %c0_i32_0 = arith.constant 0 : i32
    return %arg0, %c0_i32 : i32, i32
  }
}

</mosaic_0001>

<llo_original>
// kernel: expandable_fc_relu_cifar10.1
$region0: #{expandable_fc_relu_cifar10.1}
  #allocation0 [shape = 'u32[]', space=smem, size = 0x4, offset = 0x4, fixed_abs, tag = 'smem constant byte address 0x4 - core index']
  #allocation1 [shape = 'u32[144,128]{1,0:T(1,128)}', space=vmem, size = 0x12000, scoped, tag = 'internal scratch']
  #allocation2 [shape = 'bf16[8,128]{1,0:T(8,128)(2,1)}', space=vmem, size = 0x800, scoped, tag = 'scratch operand']
  #allocation3 [shape = 'f32[8,128]{1,0:T(8,128)}', space=vmem, size = 0x1000, scoped, tag = 'scratch operand']
  %s0 = inlined_call_operand.vmem [shape: bf16[8,3072], index: 0, kind: input, shape index: {}]
  %s1 = inlined_call_operand.vmem [shape: bf16[3072,128], index: 1, kind: input, shape index: {}]
  %s2 = inlined_call_operand.vmem [shape: f32[1,128], index: 2, kind: input, shape index: {}]
  %s3 = inlined_call_operand.vmem [shape: bf16[128,256], index: 3, kind: input, shape index: {}]
  %s4 = inlined_call_operand.vmem [shape: f32[1,256], index: 4, kind: input, shape index: {}]
  %s5 = inlined_call_operand.vmem [shape: bf16[256,128], index: 5, kind: input, shape index: {}]
  %s6 = inlined_call_operand.vmem [shape: f32[1,128], index: 6, kind: input, shape index: {}]
  %s7 = inlined_call_operand.vmem [shape: f32[8,128], index: 7, kind: output, shape index: {}]
  %s8 = sld [smem:[#allocation0]]
  $region46: #{expandable_fc_relu_cifar10.1} parent=0
    _
  %s10 = ssub.s32 1, %s8
  %s11 = scalar_select 0, %s10, %s8
  // Predicated region
  $region2: #{expandable_fc_relu_cifar10.1} parent=0 // pred_check
    _
  $region3: #{expandable_fc_relu_cifar10.1} parent=0 // pred_check_branch
    %13 = sbr.rel (0) target = $region5
  $region4: #{expandable_fc_relu_cifar10.1} parent=0 // pred_region
    _
  $region5: #{expandable_fc_relu_cifar10.1} parent=0 // pred_fallthru
    _
  // Predicated region
  $region6: #{expandable_fc_relu_cifar10.1} parent=0 // pred_check
    _
  $region7: #{expandable_fc_relu_cifar10.1} parent=0 // pred_check_branch
    %15 = sbr.rel (0) target = $region9
  $region8: #{expandable_fc_relu_cifar10.1} parent=0 // pred_region
    _
  $region9: #{expandable_fc_relu_cifar10.1} parent=0 // pred_fallthru
    _
  // Predicated region
  $region10: #{expandable_fc_relu_cifar10.1} parent=0 // pred_check
    _
  $region11: #{expandable_fc_relu_cifar10.1} parent=0 // pred_check_branch
    %17 = sbr.rel (0) target = $region13
  $region12: #{expandable_fc_relu_cifar10.1} parent=0 // pred_region
    _
  $region13: #{expandable_fc_relu_cifar10.1} parent=0 // pred_fallthru
    _
  // Predicated region
  $region14: #{expandable_fc_relu_cifar10.1} parent=0 // pred_check
    _
  $region15: #{expandable_fc_relu_cifar10.1} parent=0 // pred_check_branch
    %19 = sbr.rel (0) target = $region17
  $region16: #{expandable_fc_relu_cifar10.1} parent=0 // pred_region
    _
  $region17: #{expandable_fc_relu_cifar10.1} parent=0 // pred_fallthru
    _
  // Predicated region
  $region18: #{expandable_fc_relu_cifar10.1} parent=0 // pred_check
    _
  $region19: #{expandable_fc_relu_cifar10.1} parent=0 // pred_check_branch
    %21 = sbr.rel (0) target = $region21
  $region20: #{expandable_fc_relu_cifar10.1} parent=0 // pred_region
    _
  $region21: #{expandable_fc_relu_cifar10.1} parent=0 // pred_fallthru
    _
  // Predicated region
  $region22: #{expandable_fc_relu_cifar10.1} parent=0 // pred_check
    _
  $region23: #{expandable_fc_relu_cifar10.1} parent=0 // pred_check_branch
    %23 = sbr.rel (0) target = $region25
  $region24: #{expandable_fc_relu_cifar10.1} parent=0 // pred_region
    _
  $region25: #{expandable_fc_relu_cifar10.1} parent=0 // pred_fallthru
    _
  // Predicated region
  $region26: #{expandable_fc_relu_cifar10.1} parent=0 // pred_check
    _
  $region27: #{expandable_fc_relu_cifar10.1} parent=0 // pred_check_branch
    %25 = sbr.rel (0) target = $region29
  $region28: #{expandable_fc_relu_cifar10.1} parent=0 // pred_region
    _
  $region29: #{expandable_fc_relu_cifar10.1} parent=0 // pred_fallthru
    _
  %p27 = scmp.eq.s32.totalorder 0, 0
  // Predicated region
  $region30: #{expandable_fc_relu_cifar10.1} parent=0 // pred_check
    %p28 = pneg %p27
  $region31: #{expandable_fc_relu_cifar10.1} parent=0 // pred_check_branch
    %30 = sbr.rel (%p28) target = $region33
  $region32: #{expandable_fc_relu_cifar10.1} parent=0 // pred_region
    %v31 = vld [vmem:[%s0] sm:$0xff]
    %v32 = vld [vmem:[%s0 + $0x8] sm:$0xff]
    %v33 = vld [vmem:[%s0 + $0x10] sm:$0xff]
    %v34 = vld [vmem:[%s0 + $0x18] sm:$0xff]
    %v35 = vld [vmem:[%s0 + $0x20] sm:$0xff]
    %v36 = vld [vmem:[%s0 + $0x28] sm:$0xff]
    %v37 = vld [vmem:[%s0 + $0x30] sm:$0xff]
    %v38 = vld [vmem:[%s0 + $0x38] sm:$0xff]
    %v39 = vld [vmem:[%s0 + $0x40] sm:$0xff]
    %v40 = vld [vmem:[%s0 + $0x48] sm:$0xff]
    %v41 = vld [vmem:[%s0 + $0x50] sm:$0xff]
    %v42 = vld [vmem:[%s0 + $0x58] sm:$0xff]
    %v43 = vld [vmem:[%s1] sm:$0xf]
    %v44 = vld [vmem:[%s1 + $0x4] sm:$0xf]
    %v45 = vld [vmem:[%s1 + $0x8] sm:$0xf]
    %v46 = vld [vmem:[%s1 + $0xc] sm:$0xf]
    %v47 = vld [vmem:[%s1 + $0x10] sm:$0xf]
    %v48 = vld [vmem:[%s1 + $0x14] sm:$0xf]
    %v49 = vld [vmem:[%s1 + $0x18] sm:$0xf]
    %v50 = vld [vmem:[%s1 + $0x1c] sm:$0xf]
    %v51 = vld [vmem:[%s1 + $0x20] sm:$0xf]
    %v52 = vld [vmem:[%s1 + $0x24] sm:$0xf]
    %v53 = vld [vmem:[%s1 + $0x28] sm:$0xf]
    %v54 = vld [vmem:[%s1 + $0x2c] sm:$0xf]
    %v55 = vld [vmem:[%s1 + $0x30] sm:$0xf]
    %v56 = vld [vmem:[%s1 + $0x34] sm:$0xf]
    %v57 = vld [vmem:[%s1 + $0x38] sm:$0xf]
    %v58 = vld [vmem:[%s1 + $0x3c] sm:$0xf]
    %v59 = vld [vmem:[%s1 + $0x40] sm:$0xf]
    %v60 = vld [vmem:[%s1 + $0x44] sm:$0xf]
    %v61 = vld [vmem:[%s1 + $0x48] sm:$0xf]
    %v62 = vld [vmem:[%s1 + $0x4c] sm:$0xf]
    %v63 = vld [vmem:[%s1 + $0x50] sm:$0xf]
    %v64 = vld [vmem:[%s1 + $0x54] sm:$0xf]
    %v65 = vld [vmem:[%s1 + $0x58] sm:$0xf]
    %v66 = vld [vmem:[%s1 + $0x5c] sm:$0xf]
    %v67 = vld [vmem:[%s1 + $0x60] sm:$0xf]
    %v68 = vld [vmem:[%s1 + $0x64] sm:$0xf]
    %v69 = vld [vmem:[%s1 + $0x68] sm:$0xf]
    %v70 = vld [vmem:[%s1 + $0x6c] sm:$0xf]
    %v71 = vld [vmem:[%s1 + $0x70] sm:$0xf]
    %v72 = vld [vmem:[%s1 + $0x74] sm:$0xf]
    %v73 = vld [vmem:[%s1 + $0x78] sm:$0xf]
    %v74 = vld [vmem:[%s1 + $0x7c] sm:$0xf]
    %v75 = vld [vmem:[%s1 + $0x80] sm:$0xf]
    %v76 = vld [vmem:[%s1 + $0x84] sm:$0xf]
    %v77 = vld [vmem:[%s1 + $0x88] sm:$0xf]
    %v78 = vld [vmem:[%s1 + $0x8c] sm:$0xf]
    %v79 = vld [vmem:[%s1 + $0x90] sm:$0xf]
    %v80 = vld [vmem:[%s1 + $0x94] sm:$0xf]
    %v81 = vld [vmem:[%s1 + $0x98] sm:$0xf]
    %v82 = vld [vmem:[%s1 + $0x9c] sm:$0xf]
    %v83 = vld [vmem:[%s1 + $0xa0] sm:$0xf]
    %v84 = vld [vmem:[%s1 + $0xa4] sm:$0xf]
    %v85 = vld [vmem:[%s1 + $0xa8] sm:$0xf]
    %v86 = vld [vmem:[%s1 + $0xac] sm:$0xf]
    %v87 = vld [vmem:[%s1 + $0xb0] sm:$0xf]
    %v88 = vld [vmem:[%s1 + $0xb4] sm:$0xf]
    %v89 = vld [vmem:[%s1 + $0xb8] sm:$0xf]
    %v90 = vld [vmem:[%s1 + $0xbc] sm:$0xf]
    %v91 = vld [vmem:[%s1 + $0xc0] sm:$0xf]
    %v92 = vld [vmem:[%s1 + $0xc4] sm:$0xf]
    %v93 = vld [vmem:[%s1 + $0xc8] sm:$0xf]
    %v94 = vld [vmem:[%s1 + $0xcc] sm:$0xf]
    %v95 = vld [vmem:[%s1 + $0xd0] sm:$0xf]
    %v96 = vld [vmem:[%s1 + $0xd4] sm:$0xf]
    %v97 = vld [vmem:[%s1 + $0xd8] sm:$0xf]
    %v98 = vld [vmem:[%s1 + $0xdc] sm:$0xf]
    %v99 = vld [vmem:[%s1 + $0xe0] sm:$0xf]
    %v100 = vld [vmem:[%s1 + $0xe4] sm:$0xf]
    %v101 = vld [vmem:[%s1 + $0xe8] sm:$0xf]
    %v102 = vld [vmem:[%s1 + $0xec] sm:$0xf]
    %v103 = vld [vmem:[%s1 + $0xf0] sm:$0xf]
    %v104 = vld [vmem:[%s1 + $0xf4] sm:$0xf]
    %v105 = vld [vmem:[%s1 + $0xf8] sm:$0xf]
    %v106 = vld [vmem:[%s1 + $0xfc] sm:$0xf]
    %v107 = vld [vmem:[%s1 + $0x100] sm:$0xf]
    %v108 = vld [vmem:[%s1 + $0x104] sm:$0xf]
    %v109 = vld [vmem:[%s1 + $0x108] sm:$0xf]
    %v110 = vld [vmem:[%s1 + $0x10c] sm:$0xf]
    %v111 = vld [vmem:[%s1 + $0x110] sm:$0xf]
    %v112 = vld [vmem:[%s1 + $0x114] sm:$0xf]
    %v113 = vld [vmem:[%s1 + $0x118] sm:$0xf]
    %v114 = vld [vmem:[%s1 + $0x11c] sm:$0xf]
    %v115 = vld [vmem:[%s1 + $0x120] sm:$0xf]
    %v116 = vld [vmem:[%s1 + $0x124] sm:$0xf]
    %v117 = vld [vmem:[%s1 + $0x128] sm:$0xf]
    %v118 = vld [vmem:[%s1 + $0x12c] sm:$0xf]
    %v119 = vld [vmem:[%s1 + $0x130] sm:$0xf]
    %v120 = vld [vmem:[%s1 + $0x134] sm:$0xf]
    %v121 = vld [vmem:[%s1 + $0x138] sm:$0xf]
    %v122 = vld [vmem:[%s1 + $0x13c] sm:$0xf]
    %v123 = vld [vmem:[%s1 + $0x140] sm:$0xf]
    %v124 = vld [vmem:[%s1 + $0x144] sm:$0xf]
    %v125 = vld [vmem:[%s1 + $0x148] sm:$0xf]
    %v126 = vld [vmem:[%s1 + $0x14c] sm:$0xf]
    %v127 = vld [vmem:[%s1 + $0x150] sm:$0xf]
    %v128 = vld [vmem:[%s1 + $0x154] sm:$0xf]
    %v129 = vld [vmem:[%s1 + $0x158] sm:$0xf]
    %v130 = vld [vmem:[%s1 + $0x15c] sm:$0xf]
    %v131 = vld [vmem:[%s1 + $0x160] sm:$0xf]
    %v132 = vld [vmem:[%s1 + $0x164] sm:$0xf]
    %v133 = vld [vmem:[%s1 + $0x168] sm:$0xf]
    %v134 = vld [vmem:[%s1 + $0x16c] sm:$0xf]
    %v135 = vld [vmem:[%s1 + $0x170] sm:$0xf]
    %v136 = vld [vmem:[%s1 + $0x174] sm:$0xf]
    %v137 = vld [vmem:[%s1 + $0x178] sm:$0xf]
    %v138 = vld [vmem:[%s1 + $0x17c] sm:$0xf]
    %v139 = vld [vmem:[%s1 + $0x180] sm:$0xf]
    %v140 = vld [vmem:[%s1 + $0x184] sm:$0xf]
    %v141 = vld [vmem:[%s1 + $0x188] sm:$0xf]
    %v142 = vld [vmem:[%s1 + $0x18c] sm:$0xf]
    %v143 = vld [vmem:[%s1 + $0x190] sm:$0xf]
    %v144 = vld [vmem:[%s1 + $0x194] sm:$0xf]
    %v145 = vld [vmem:[%s1 + $0x198] sm:$0xf]
    %v146 = vld [vmem:[%s1 + $0x19c] sm:$0xf]
    %v147 = vld [vmem:[%s1 + $0x1a0] sm:$0xf]
    %v148 = vld [vmem:[%s1 + $0x1a4] sm:$0xf]
    %v149 = vld [vmem:[%s1 + $0x1a8] sm:$0xf]
    %v150 = vld [vmem:[%s1 + $0x1ac] sm:$0xf]
    %v151 = vld [vmem:[%s1 + $0x1b0] sm:$0xf]
    %v152 = vld [vmem:[%s1 + $0x1b4] sm:$0xf]
    %v153 = vld [vmem:[%s1 + $0x1b8] sm:$0xf]
    %v154 = vld [vmem:[%s1 + $0x1bc] sm:$0xf]
    %v155 = vld [vmem:[%s1 + $0x1c0] sm:$0xf]
    %v156 = vld [vmem:[%s1 + $0x1c4] sm:$0xf]
    %v157 = vld [vmem:[%s1 + $0x1c8] sm:$0xf]
    %v158 = vld [vmem:[%s1 + $0x1cc] sm:$0xf]
    %v159 = vld [vmem:[%s1 + $0x1d0] sm:$0xf]
    %v160 = vld [vmem:[%s1 + $0x1d4] sm:$0xf]
    %v161 = vld [vmem:[%s1 + $0x1d8] sm:$0xf]
    %v162 = vld [vmem:[%s1 + $0x1dc] sm:$0xf]
    %v163 = vld [vmem:[%s1 + $0x1e0] sm:$0xf]
    %v164 = vld [vmem:[%s1 + $0x1e4] sm:$0xf]
    %v165 = vld [vmem:[%s1 + $0x1e8] sm:$0xf]
    %v166 = vld [vmem:[%s1 + $0x1ec] sm:$0xf]
    %v167 = vld [vmem:[%s1 + $0x1f0] sm:$0xf]
    %v168 = vld [vmem:[%s1 + $0x1f4] sm:$0xf]
    %v169 = vld [vmem:[%s1 + $0x1f8] sm:$0xf]
    %v170 = vld [vmem:[%s1 + $0x1fc] sm:$0xf]
    %v171 = vld [vmem:[%s1 + $0x200] sm:$0xf]
    %v172 = vld [vmem:[%s1 + $0x204] sm:$0xf]
    %v173 = vld [vmem:[%s1 + $0x208] sm:$0xf]
    %v174 = vld [vmem:[%s1 + $0x20c] sm:$0xf]
    %v175 = vld [vmem:[%s1 + $0x210] sm:$0xf]
    %v176 = vld [vmem:[%s1 + $0x214] sm:$0xf]
    %v177 = vld [vmem:[%s1 + $0x218] sm:$0xf]
    %v178 = vld [vmem:[%s1 + $0x21c] sm:$0xf]
    %v179 = vld [vmem:[%s1 + $0x220] sm:$0xf]
    %v180 = vld [vmem:[%s1 + $0x224] sm:$0xf]
    %v181 = vld [vmem:[%s1 + $0x228] sm:$0xf]
    %v182 = vld [vmem:[%s1 + $0x22c] sm:$0xf]
    %v183 = vld [vmem:[%s1 + $0x230] sm:$0xf]
    %v184 = vld [vmem:[%s1 + $0x234] sm:$0xf]
    %v185 = vld [vmem:[%s1 + $0x238] sm:$0xf]
    %v186 = vld [vmem:[%s1 + $0x23c] sm:$0xf]
    %v187 = vld [vmem:[%s1 + $0x240] sm:$0xf]
    %v188 = vld [vmem:[%s1 + $0x244] sm:$0xf]
    %v189 = vld [vmem:[%s1 + $0x248] sm:$0xf]
    %v190 = vld [vmem:[%s1 + $0x24c] sm:$0xf]
    %v191 = vld [vmem:[%s1 + $0x250] sm:$0xf]
    %v192 = vld [vmem:[%s1 + $0x254] sm:$0xf]
    %v193 = vld [vmem:[%s1 + $0x258] sm:$0xf]
    %v194 = vld [vmem:[%s1 + $0x25c] sm:$0xf]
    %v195 = vld [vmem:[%s1 + $0x260] sm:$0xf]
    %v196 = vld [vmem:[%s1 + $0x264] sm:$0xf]
    %v197 = vld [vmem:[%s1 + $0x268] sm:$0xf]
    %v198 = vld [vmem:[%s1 + $0x26c] sm:$0xf]
    %v199 = vld [vmem:[%s1 + $0x270] sm:$0xf]
    %v200 = vld [vmem:[%s1 + $0x274] sm:$0xf]
    %v201 = vld [vmem:[%s1 + $0x278] sm:$0xf]
    %v202 = vld [vmem:[%s1 + $0x27c] sm:$0xf]
    %v203 = vld [vmem:[%s1 + $0x280] sm:$0xf]
    %v204 = vld [vmem:[%s1 + $0x284] sm:$0xf]
    %v205 = vld [vmem:[%s1 + $0x288] sm:$0xf]
    %v206 = vld [vmem:[%s1 + $0x28c] sm:$0xf]
    %v207 = vld [vmem:[%s1 + $0x290] sm:$0xf]
    %v208 = vld [vmem:[%s1 + $0x294] sm:$0xf]
    %v209 = vld [vmem:[%s1 + $0x298] sm:$0xf]
    %v210 = vld [vmem:[%s1 + $0x29c] sm:$0xf]
    %v211 = vld [vmem:[%s1 + $0x2a0] sm:$0xf]
    %v212 = vld [vmem:[%s1 + $0x2a4] sm:$0xf]
    %v213 = vld [vmem:[%s1 + $0x2a8] sm:$0xf]
    %v214 = vld [vmem:[%s1 + $0x2ac] sm:$0xf]
    %v215 = vld [vmem:[%s1 + $0x2b0] sm:$0xf]
    %v216 = vld [vmem:[%s1 + $0x2b4] sm:$0xf]
    %v217 = vld [vmem:[%s1 + $0x2b8] sm:$0xf]
    %v218 = vld [vmem:[%s1 + $0x2bc] sm:$0xf]
    %v219 = vld [vmem:[%s1 + $0x2c0] sm:$0xf]
    %v220 = vld [vmem:[%s1 + $0x2c4] sm:$0xf]
    %v221 = vld [vmem:[%s1 + $0x2c8] sm:$0xf]
    %v222 = vld [vmem:[%s1 + $0x2cc] sm:$0xf]
    %v223 = vld [vmem:[%s1 + $0x2d0] sm:$0xf]
    %v224 = vld [vmem:[%s1 + $0x2d4] sm:$0xf]
    %v225 = vld [vmem:[%s1 + $0x2d8] sm:$0xf]
    %v226 = vld [vmem:[%s1 + $0x2dc] sm:$0xf]
    %v227 = vld [vmem:[%s1 + $0x2e0] sm:$0xf]
    %v228 = vld [vmem:[%s1 + $0x2e4] sm:$0xf]
    %v229 = vld [vmem:[%s1 + $0x2e8] sm:$0xf]
    %v230 = vld [vmem:[%s1 + $0x2ec] sm:$0xf]
    %v231 = vld [vmem:[%s1 + $0x2f0] sm:$0xf]
    %v232 = vld [vmem:[%s1 + $0x2f4] sm:$0xf]
    %v233 = vld [vmem:[%s1 + $0x2f8] sm:$0xf]
    %v234 = vld [vmem:[%s1 + $0x2fc] sm:$0xf]
    %v235 = vld [vmem:[%s1 + $0x300] sm:$0xf]
    %v236 = vld [vmem:[%s1 + $0x304] sm:$0xf]
    %v237 = vld [vmem:[%s1 + $0x308] sm:$0xf]
    %v238 = vld [vmem:[%s1 + $0x30c] sm:$0xf]
    %v239 = vld [vmem:[%s1 + $0x310] sm:$0xf]
    %v240 = vld [vmem:[%s1 + $0x314] sm:$0xf]
    %v241 = vld [vmem:[%s1 + $0x318] sm:$0xf]
    %v242 = vld [vmem:[%s1 + $0x31c] sm:$0xf]
    %v243 = vld [vmem:[%s1 + $0x320] sm:$0xf]
    %v244 = vld [vmem:[%s1 + $0x324] sm:$0xf]
    %v245 = vld [vmem:[%s1 + $0x328] sm:$0xf]
    %v246 = vld [vmem:[%s1 + $0x32c] sm:$0xf]
    %v247 = vld [vmem:[%s1 + $0x330] sm:$0xf]
    %v248 = vld [vmem:[%s1 + $0x334] sm:$0xf]
    %v249 = vld [vmem:[%s1 + $0x338] sm:$0xf]
    %v250 = vld [vmem:[%s1 + $0x33c] sm:$0xf]
    %v251 = vld [vmem:[%s1 + $0x340] sm:$0xf]
    %v252 = vld [vmem:[%s1 + $0x344] sm:$0xf]
    %v253 = vld [vmem:[%s1 + $0x348] sm:$0xf]
    %v254 = vld [vmem:[%s1 + $0x34c] sm:$0xf]
    %v255 = vld [vmem:[%s1 + $0x350] sm:$0xf]
    %v256 = vld [vmem:[%s1 + $0x354] sm:$0xf]
    %v257 = vld [vmem:[%s1 + $0x358] sm:$0xf]
    %v258 = vld [vmem:[%s1 + $0x35c] sm:$0xf]
    %v259 = vld [vmem:[%s1 + $0x360] sm:$0xf]
    %v260 = vld [vmem:[%s1 + $0x364] sm:$0xf]
    %v261 = vld [vmem:[%s1 + $0x368] sm:$0xf]
    %v262 = vld [vmem:[%s1 + $0x36c] sm:$0xf]
    %v263 = vld [vmem:[%s1 + $0x370] sm:$0xf]
    %v264 = vld [vmem:[%s1 + $0x374] sm:$0xf]
    %v265 = vld [vmem:[%s1 + $0x378] sm:$0xf]
    %v266 = vld [vmem:[%s1 + $0x37c] sm:$0xf]
    %v267 = vld [vmem:[%s1 + $0x380] sm:$0xf]
    %v268 = vld [vmem:[%s1 + $0x384] sm:$0xf]
    %v269 = vld [vmem:[%s1 + $0x388] sm:$0xf]
    %v270 = vld [vmem:[%s1 + $0x38c] sm:$0xf]
    %v271 = vld [vmem:[%s1 + $0x390] sm:$0xf]
    %v272 = vld [vmem:[%s1 + $0x394] sm:$0xf]
    %v273 = vld [vmem:[%s1 + $0x398] sm:$0xf]
    %v274 = vld [vmem:[%s1 + $0x39c] sm:$0xf]
    %v275 = vld [vmem:[%s1 + $0x3a0] sm:$0xf]
    %v276 = vld [vmem:[%s1 + $0x3a4] sm:$0xf]
    %v277 = vld [vmem:[%s1 + $0x3a8] sm:$0xf]
    %v278 = vld [vmem:[%s1 + $0x3ac] sm:$0xf]
    %v279 = vld [vmem:[%s1 + $0x3b0] sm:$0xf]
    %v280 = vld [vmem:[%s1 + $0x3b4] sm:$0xf]
    %v281 = vld [vmem:[%s1 + $0x3b8] sm:$0xf]
    %v282 = vld [vmem:[%s1 + $0x3bc] sm:$0xf]
    %v283 = vld [vmem:[%s1 + $0x3c0] sm:$0xf]
    %v284 = vld [vmem:[%s1 + $0x3c4] sm:$0xf]
    %v285 = vld [vmem:[%s1 + $0x3c8] sm:$0xf]
    %v286 = vld [vmem:[%s1 + $0x3cc] sm:$0xf]
    %v287 = vld [vmem:[%s1 + $0x3d0] sm:$0xf]
    %v288 = vld [vmem:[%s1 + $0x3d4] sm:$0xf]
    %v289 = vld [vmem:[%s1 + $0x3d8] sm:$0xf]
    %v290 = vld [vmem:[%s1 + $0x3dc] sm:$0xf]
    %v291 = vld [vmem:[%s1 + $0x3e0] sm:$0xf]
    %v292 = vld [vmem:[%s1 + $0x3e4] sm:$0xf]
    %v293 = vld [vmem:[%s1 + $0x3e8] sm:$0xf]
    %v294 = vld [vmem:[%s1 + $0x3ec] sm:$0xf]
    %v295 = vld [vmem:[%s1 + $0x3f0] sm:$0xf]
    %v296 = vld [vmem:[%s1 + $0x3f4] sm:$0xf]
    %v297 = vld [vmem:[%s1 + $0x3f8] sm:$0xf]
    %v298 = vld [vmem:[%s1 + $0x3fc] sm:$0xf]
    %v299 = vld [vmem:[%s1 + $0x400] sm:$0xf]
    %v300 = vld [vmem:[%s1 + $0x404] sm:$0xf]
    %v301 = vld [vmem:[%s1 + $0x408] sm:$0xf]
    %v302 = vld [vmem:[%s1 + $0x40c] sm:$0xf]
    %v303 = vld [vmem:[%s1 + $0x410] sm:$0xf]
    %v304 = vld [vmem:[%s1 + $0x414] sm:$0xf]
    %v305 = vld [vmem:[%s1 + $0x418] sm:$0xf]
    %v306 = vld [vmem:[%s1 + $0x41c] sm:$0xf]
    %v307 = vld [vmem:[%s1 + $0x420] sm:$0xf]
    %v308 = vld [vmem:[%s1 + $0x424] sm:$0xf]
    %v309 = vld [vmem:[%s1 + $0x428] sm:$0xf]
    %v310 = vld [vmem:[%s1 + $0x42c] sm:$0xf]
    %v311 = vld [vmem:[%s1 + $0x430] sm:$0xf]
    %v312 = vld [vmem:[%s1 + $0x434] sm:$0xf]
    %v313 = vld [vmem:[%s1 + $0x438] sm:$0xf]
    %v314 = vld [vmem:[%s1 + $0x43c] sm:$0xf]
    %v315 = vld [vmem:[%s1 + $0x440] sm:$0xf]
    %v316 = vld [vmem:[%s1 + $0x444] sm:$0xf]
    %v317 = vld [vmem:[%s1 + $0x448] sm:$0xf]
    %v318 = vld [vmem:[%s1 + $0x44c] sm:$0xf]
    %v319 = vld [vmem:[%s1 + $0x450] sm:$0xf]
    %v320 = vld [vmem:[%s1 + $0x454] sm:$0xf]
    %v321 = vld [vmem:[%s1 + $0x458] sm:$0xf]
    %v322 = vld [vmem:[%s1 + $0x45c] sm:$0xf]
    %v323 = vld [vmem:[%s1 + $0x460] sm:$0xf]
    %v324 = vld [vmem:[%s1 + $0x464] sm:$0xf]
    %v325 = vld [vmem:[%s1 + $0x468] sm:$0xf]
    %v326 = vld [vmem:[%s1 + $0x46c] sm:$0xf]
    %v327 = vld [vmem:[%s1 + $0x470] sm:$0xf]
    %v328 = vld [vmem:[%s1 + $0x474] sm:$0xf]
    %v329 = vld [vmem:[%s1 + $0x478] sm:$0xf]
    %v330 = vld [vmem:[%s1 + $0x47c] sm:$0xf]
    %v331 = vld [vmem:[%s1 + $0x480] sm:$0xf]
    %v332 = vld [vmem:[%s1 + $0x484] sm:$0xf]
    %v333 = vld [vmem:[%s1 + $0x488] sm:$0xf]
    %v334 = vld [vmem:[%s1 + $0x48c] sm:$0xf]
    %v335 = vld [vmem:[%s1 + $0x490] sm:$0xf]
    %v336 = vld [vmem:[%s1 + $0x494] sm:$0xf]
    %v337 = vld [vmem:[%s1 + $0x498] sm:$0xf]
    %v338 = vld [vmem:[%s1 + $0x49c] sm:$0xf]
    %v339 = vld [vmem:[%s1 + $0x4a0] sm:$0xf]
    %v340 = vld [vmem:[%s1 + $0x4a4] sm:$0xf]
    %v341 = vld [vmem:[%s1 + $0x4a8] sm:$0xf]
    %v342 = vld [vmem:[%s1 + $0x4ac] sm:$0xf]
    %v343 = vld [vmem:[%s1 + $0x4b0] sm:$0xf]
    %v344 = vld [vmem:[%s1 + $0x4b4] sm:$0xf]
    %v345 = vld [vmem:[%s1 + $0x4b8] sm:$0xf]
    %v346 = vld [vmem:[%s1 + $0x4bc] sm:$0xf]
    %v347 = vld [vmem:[%s1 + $0x4c0] sm:$0xf]
    %v348 = vld [vmem:[%s1 + $0x4c4] sm:$0xf]
    %v349 = vld [vmem:[%s1 + $0x4c8] sm:$0xf]
    %v350 = vld [vmem:[%s1 + $0x4cc] sm:$0xf]
    %v351 = vld [vmem:[%s1 + $0x4d0] sm:$0xf]
    %v352 = vld [vmem:[%s1 + $0x4d4] sm:$0xf]
    %v353 = vld [vmem:[%s1 + $0x4d8] sm:$0xf]
    %v354 = vld [vmem:[%s1 + $0x4dc] sm:$0xf]
    %v355 = vld [vmem:[%s1 + $0x4e0] sm:$0xf]
    %v356 = vld [vmem:[%s1 + $0x4e4] sm:$0xf]
    %v357 = vld [vmem:[%s1 + $0x4e8] sm:$0xf]
    %v358 = vld [vmem:[%s1 + $0x4ec] sm:$0xf]
    %v359 = vld [vmem:[%s1 + $0x4f0] sm:$0xf]
    %v360 = vld [vmem:[%s1 + $0x4f4] sm:$0xf]
    %v361 = vld [vmem:[%s1 + $0x4f8] sm:$0xf]
    %v362 = vld [vmem:[%s1 + $0x4fc] sm:$0xf]
    %v363 = vld [vmem:[%s1 + $0x500] sm:$0xf]
    %v364 = vld [vmem:[%s1 + $0x504] sm:$0xf]
    %v365 = vld [vmem:[%s1 + $0x508] sm:$0xf]
    %v366 = vld [vmem:[%s1 + $0x50c] sm:$0xf]
    %v367 = vld [vmem:[%s1 + $0x510] sm:$0xf]
    %v368 = vld [vmem:[%s1 + $0x514] sm:$0xf]
    %v369 = vld [vmem:[%s1 + $0x518] sm:$0xf]
    %v370 = vld [vmem:[%s1 + $0x51c] sm:$0xf]
    %v371 = vld [vmem:[%s1 + $0x520] sm:$0xf]
    %v372 = vld [vmem:[%s1 + $0x524] sm:$0xf]
    %v373 = vld [vmem:[%s1 + $0x528] sm:$0xf]
    %v374 = vld [vmem:[%s1 + $0x52c] sm:$0xf]
    %v375 = vld [vmem:[%s1 + $0x530] sm:$0xf]
    %v376 = vld [vmem:[%s1 + $0x534] sm:$0xf]
    %v377 = vld [vmem:[%s1 + $0x538] sm:$0xf]
    %v378 = vld [vmem:[%s1 + $0x53c] sm:$0xf]
    %v379 = vld [vmem:[%s1 + $0x540] sm:$0xf]
    %v380 = vld [vmem:[%s1 + $0x544] sm:$0xf]
    %v381 = vld [vmem:[%s1 + $0x548] sm:$0xf]
    %v382 = vld [vmem:[%s1 + $0x54c] sm:$0xf]
    %v383 = vld [vmem:[%s1 + $0x550] sm:$0xf]
    %v384 = vld [vmem:[%s1 + $0x554] sm:$0xf]
    %v385 = vld [vmem:[%s1 + $0x558] sm:$0xf]
    %v386 = vld [vmem:[%s1 + $0x55c] sm:$0xf]
    %v387 = vld [vmem:[%s1 + $0x560] sm:$0xf]
    %v388 = vld [vmem:[%s1 + $0x564] sm:$0xf]
    %v389 = vld [vmem:[%s1 + $0x568] sm:$0xf]
    %v390 = vld [vmem:[%s1 + $0x56c] sm:$0xf]
    %v391 = vld [vmem:[%s1 + $0x570] sm:$0xf]
    %v392 = vld [vmem:[%s1 + $0x574] sm:$0xf]
    %v393 = vld [vmem:[%s1 + $0x578] sm:$0xf]
    %v394 = vld [vmem:[%s1 + $0x57c] sm:$0xf]
    %v395 = vld [vmem:[%s1 + $0x580] sm:$0xf]
    %v396 = vld [vmem:[%s1 + $0x584] sm:$0xf]
    %v397 = vld [vmem:[%s1 + $0x588] sm:$0xf]
    %v398 = vld [vmem:[%s1 + $0x58c] sm:$0xf]
    %v399 = vld [vmem:[%s1 + $0x590] sm:$0xf]
    %v400 = vld [vmem:[%s1 + $0x594] sm:$0xf]
    %v401 = vld [vmem:[%s1 + $0x598] sm:$0xf]
    %v402 = vld [vmem:[%s1 + $0x59c] sm:$0xf]
    %v403 = vld [vmem:[%s1 + $0x5a0] sm:$0xf]
    %v404 = vld [vmem:[%s1 + $0x5a4] sm:$0xf]
    %v405 = vld [vmem:[%s1 + $0x5a8] sm:$0xf]
    %v406 = vld [vmem:[%s1 + $0x5ac] sm:$0xf]
    %v407 = vld [vmem:[%s1 + $0x5b0] sm:$0xf]
    %v408 = vld [vmem:[%s1 + $0x5b4] sm:$0xf]
    %v409 = vld [vmem:[%s1 + $0x5b8] sm:$0xf]
    %v410 = vld [vmem:[%s1 + $0x5bc] sm:$0xf]
    %v411 = vld [vmem:[%s1 + $0x5c0] sm:$0xf]
    %v412 = vld [vmem:[%s1 + $0x5c4] sm:$0xf]
    %v413 = vld [vmem:[%s1 + $0x5c8] sm:$0xf]
    %v414 = vld [vmem:[%s1 + $0x5cc] sm:$0xf]
    %v415 = vld [vmem:[%s1 + $0x5d0] sm:$0xf]
    %v416 = vld [vmem:[%s1 + $0x5d4] sm:$0xf]
    %v417 = vld [vmem:[%s1 + $0x5d8] sm:$0xf]
    %v418 = vld [vmem:[%s1 + $0x5dc] sm:$0xf]
    %v419 = vld [vmem:[%s1 + $0x5e0] sm:$0xf]
    %v420 = vld [vmem:[%s1 + $0x5e4] sm:$0xf]
    %v421 = vld [vmem:[%s1 + $0x5e8] sm:$0xf]
    %v422 = vld [vmem:[%s1 + $0x5ec] sm:$0xf]
    %v423 = vld [vmem:[%s1 + $0x5f0] sm:$0xf]
    %v424 = vld [vmem:[%s1 + $0x5f4] sm:$0xf]
    %v425 = vld [vmem:[%s1 + $0x5f8] sm:$0xf]
    %v426 = vld [vmem:[%s1 + $0x5fc] sm:$0xf]
    %v427 = vld [vmem:[%s2] sm:$0x1]
    %v429 = vlaneseq
    %v430 = vshrl.u32 %v429, 7
    %v431 = vsub.s32 0, %v430
    %v432 = vrot.slane %v427, %v431
    %v446 = vunpack.c.l.b16 %v31
    %v447 = vunpack.c.h.b16 %v31
    %v448 = vunpack.c.l.b16 %v32
    %v449 = vunpack.c.h.b16 %v32
    %v450 = vunpack.c.l.b16 %v33
    %v451 = vunpack.c.h.b16 %v33
    %v452 = vunpack.c.l.b16 %v34
    %v453 = vunpack.c.h.b16 %v34
    %v454 = vunpack.c.l.b16 %v35
    %v455 = vunpack.c.h.b16 %v35
    %v456 = vunpack.c.l.b16 %v36
    %v457 = vunpack.c.h.b16 %v36
    %v458 = vunpack.c.l.b16 %v37
    %v459 = vunpack.c.h.b16 %v37
    %v460 = vunpack.c.l.b16 %v38
    %v461 = vunpack.c.h.b16 %v38
    %v462 = vunpack.c.l.b16 %v39
    %v463 = vunpack.c.h.b16 %v39
    %v464 = vunpack.c.l.b16 %v40
    %v465 = vunpack.c.h.b16 %v40
    %v466 = vunpack.c.l.b16 %v41
    %v467 = vunpack.c.h.b16 %v41
    %v468 = vunpack.c.l.b16 %v42
    %v469 = vunpack.c.h.b16 %v42
    %v470 = vpack.c.b16 %v446, %v446
    %v471 = vpack.c.b16 %v447, %v447
    %v472 = vpack.c.b16 %v448, %v448
    %v473 = vpack.c.b16 %v449, %v449
    %v474 = vpack.c.b16 %v450, %v450
    %v475 = vpack.c.b16 %v451, %v451
    %v476 = vpack.c.b16 %v452, %v452
    %v477 = vpack.c.b16 %v453, %v453
    %v478 = vpack.c.b16 %v454, %v454
    %v479 = vpack.c.b16 %v455, %v455
    %v480 = vpack.c.b16 %v456, %v456
    %v481 = vpack.c.b16 %v457, %v457
    %v482 = vpack.c.b16 %v458, %v458
    %v483 = vpack.c.b16 %v459, %v459
    %v484 = vpack.c.b16 %v460, %v460
    %v485 = vpack.c.b16 %v461, %v461
    %v486 = vpack.c.b16 %v462, %v462
    %v487 = vpack.c.b16 %v463, %v463
    %v488 = vpack.c.b16 %v464, %v464
    %v489 = vpack.c.b16 %v465, %v465
    %v490 = vpack.c.b16 %v466, %v466
    %v491 = vpack.c.b16 %v467, %v467
    %v492 = vpack.c.b16 %v468, %v468
    %v493 = vpack.c.b16 %v469, %v469
    %v902 = vunpack.c.l.b16 %v43
    %v903 = vunpack.c.l.b16 %v44
    %v904 = vunpack.c.l.b16 %v45
    %v905 = vunpack.c.l.b16 %v46
    %v906 = vunpack.c.l.b16 %v47
    %v907 = vunpack.c.l.b16 %v48
    %v908 = vunpack.c.l.b16 %v49
    %v909 = vunpack.c.l.b16 %v50
    %v910 = vunpack.c.l.b16 %v51
    %v911 = vunpack.c.l.b16 %v52
    %v912 = vunpack.c.l.b16 %v53
    %v913 = vunpack.c.l.b16 %v54
    %v914 = vunpack.c.l.b16 %v55
    %v915 = vunpack.c.l.b16 %v56
    %v916 = vunpack.c.l.b16 %v57
    %v917 = vunpack.c.l.b16 %v58
    %v918 = vunpack.c.l.b16 %v59
    %v919 = vunpack.c.l.b16 %v60
    %v920 = vunpack.c.l.b16 %v61
    %v921 = vunpack.c.l.b16 %v62
    %v922 = vunpack.c.l.b16 %v63
    %v923 = vunpack.c.l.b16 %v64
    %v924 = vunpack.c.l.b16 %v65
    %v925 = vunpack.c.l.b16 %v66
    %v926 = vunpack.c.l.b16 %v67
    %v927 = vunpack.c.l.b16 %v68
    %v928 = vunpack.c.l.b16 %v69
    %v929 = vunpack.c.l.b16 %v70
    %v930 = vunpack.c.l.b16 %v71
    %v931 = vunpack.c.l.b16 %v72
    %v932 = vunpack.c.l.b16 %v73
    %v933 = vunpack.c.l.b16 %v74
    %v934 = vunpack.c.l.b16 %v75
    %v935 = vunpack.c.l.b16 %v76
    %v936 = vunpack.c.l.b16 %v77
    %v937 = vunpack.c.l.b16 %v78
    %v938 = vunpack.c.l.b16 %v79
    %v939 = vunpack.c.l.b16 %v80
    %v940 = vunpack.c.l.b16 %v81
    %v941 = vunpack.c.l.b16 %v82
    %v942 = vunpack.c.l.b16 %v83
    %v943 = vunpack.c.l.b16 %v84
    %v944 = vunpack.c.l.b16 %v85
    %v945 = vunpack.c.l.b16 %v86
    %v946 = vunpack.c.l.b16 %v87
    %v947 = vunpack.c.l.b16 %v88
    %v948 = vunpack.c.l.b16 %v89
    %v949 = vunpack.c.l.b16 %v90
    %v950 = vunpack.c.l.b16 %v91
    %v951 = vunpack.c.l.b16 %v92
    %v952 = vunpack.c.l.b16 %v93
    %v953 = vunpack.c.l.b16 %v94
    %v954 = vunpack.c.l.b16 %v95
    %v955 = vunpack.c.l.b16 %v96
    %v956 = vunpack.c.l.b16 %v97
    %v957 = vunpack.c.l.b16 %v98
    %v958 = vunpack.c.l.b16 %v99
    %v959 = vunpack.c.l.b16 %v100
    %v960 = vunpack.c.l.b16 %v101
    %v961 = vunpack.c.l.b16 %v102
    %v962 = vunpack.c.l.b16 %v103
    %v963 = vunpack.c.l.b16 %v104
    %v964 = vunpack.c.l.b16 %v105
    %v965 = vunpack.c.l.b16 %v106
    %v966 = vunpack.c.l.b16 %v107
    %v967 = vunpack.c.l.b16 %v108
    %v968 = vunpack.c.l.b16 %v109
    %v969 = vunpack.c.l.b16 %v110
    %v970 = vunpack.c.l.b16 %v111
    %v971 = vunpack.c.l.b16 %v112
    %v972 = vunpack.c.l.b16 %v113
    %v973 = vunpack.c.l.b16 %v114
    %v974 = vunpack.c.l.b16 %v115
    %v975 = vunpack.c.l.b16 %v116
    %v976 = vunpack.c.l.b16 %v117
    %v977 = vunpack.c.l.b16 %v118
    %v978 = vunpack.c.l.b16 %v119
    %v979 = vunpack.c.l.b16 %v120
    %v980 = vunpack.c.l.b16 %v121
    %v981 = vunpack.c.l.b16 %v122
    %v982 = vunpack.c.l.b16 %v123
    %v983 = vunpack.c.l.b16 %v124
    %v984 = vunpack.c.l.b16 %v125
    %v985 = vunpack.c.l.b16 %v126
    %v986 = vunpack.c.l.b16 %v127
    %v987 = vunpack.c.l.b16 %v128
    %v988 = vunpack.c.l.b16 %v129
    %v989 = vunpack.c.l.b16 %v130
    %v990 = vunpack.c.l.b16 %v131
    %v991 = vunpack.c.l.b16 %v132
    %v992 = vunpack.c.l.b16 %v133
    %v993 = vunpack.c.l.b16 %v134
    %v994 = vunpack.c.l.b16 %v135
    %v995 = vunpack.c.l.b16 %v136
    %v996 = vunpack.c.l.b16 %v137
    %v997 = vunpack.c.l.b16 %v138
    %v998 = vunpack.c.l.b16 %v139
    %v999 = vunpack.c.l.b16 %v140
    %v1000 = vunpack.c.l.b16 %v141
    %v1001 = vunpack.c.l.b16 %v142
    %v1002 = vunpack.c.l.b16 %v143
    %v1003 = vunpack.c.l.b16 %v144
    %v1004 = vunpack.c.l.b16 %v145
    %v1005 = vunpack.c.l.b16 %v146
    %v1006 = vunpack.c.l.b16 %v147
    %v1007 = vunpack.c.l.b16 %v148
    %v1008 = vunpack.c.l.b16 %v149
    %v1009 = vunpack.c.l.b16 %v150
    %v1010 = vunpack.c.l.b16 %v151
    %v1011 = vunpack.c.l.b16 %v152
    %v1012 = vunpack.c.l.b16 %v153
    %v1013 = vunpack.c.l.b16 %v154
    %v1014 = vunpack.c.l.b16 %v155
    %v1015 = vunpack.c.l.b16 %v156
    %v1016 = vunpack.c.l.b16 %v157
    %v1017 = vunpack.c.l.b16 %v158
    %v1018 = vunpack.c.l.b16 %v159
    %v1019 = vunpack.c.l.b16 %v160
    %v1020 = vunpack.c.l.b16 %v161
    %v1021 = vunpack.c.l.b16 %v162
    %v1022 = vunpack.c.l.b16 %v163
    %v1023 = vunpack.c.l.b16 %v164
    %v1024 = vunpack.c.l.b16 %v165
    %v1025 = vunpack.c.l.b16 %v166
    %v1026 = vunpack.c.l.b16 %v167
    %v1027 = vunpack.c.l.b16 %v168
    %v1028 = vunpack.c.l.b16 %v169
    %v1029 = vunpack.c.l.b16 %v170
    %v1030 = vunpack.c.l.b16 %v171
    %v1031 = vunpack.c.l.b16 %v172
    %v1032 = vunpack.c.l.b16 %v173
    %v1033 = vunpack.c.l.b16 %v174
    %v1034 = vunpack.c.l.b16 %v175
    %v1035 = vunpack.c.l.b16 %v176
    %v1036 = vunpack.c.l.b16 %v177
    %v1037 = vunpack.c.l.b16 %v178
    %v1038 = vunpack.c.l.b16 %v179
    %v1039 = vunpack.c.l.b16 %v180
    %v1040 = vunpack.c.l.b16 %v181
    %v1041 = vunpack.c.l.b16 %v182
    %v1042 = vunpack.c.l.b16 %v183
    %v1043 = vunpack.c.l.b16 %v184
    %v1044 = vunpack.c.l.b16 %v185
    %v1045 = vunpack.c.l.b16 %v186
    %v1046 = vunpack.c.l.b16 %v187
    %v1047 = vunpack.c.l.b16 %v188
    %v1048 = vunpack.c.l.b16 %v189
    %v1049 = vunpack.c.l.b16 %v190
    %v1050 = vunpack.c.l.b16 %v191
    %v1051 = vunpack.c.l.b16 %v192
    %v1052 = vunpack.c.l.b16 %v193
    %v1053 = vunpack.c.l.b16 %v194
    %v1054 = vunpack.c.l.b16 %v195
    %v1055 = vunpack.c.l.b16 %v196
    %v1056 = vunpack.c.l.b16 %v197
    %v1057 = vunpack.c.l.b16 %v198
    %v1058 = vunpack.c.l.b16 %v199
    %v1059 = vunpack.c.l.b16 %v200
    %v1060 = vunpack.c.l.b16 %v201
    %v1061 = vunpack.c.l.b16 %v202
    %v1062 = vunpack.c.l.b16 %v203
    %v1063 = vunpack.c.l.b16 %v204
    %v1064 = vunpack.c.l.b16 %v205
    %v1065 = vunpack.c.l.b16 %v206
    %v1066 = vunpack.c.l.b16 %v207
    %v1067 = vunpack.c.l.b16 %v208
    %v1068 = vunpack.c.l.b16 %v209
    %v1069 = vunpack.c.l.b16 %v210
    %v1070 = vunpack.c.l.b16 %v211
    %v1071 = vunpack.c.l.b16 %v212
    %v1072 = vunpack.c.l.b16 %v213
    %v1073 = vunpack.c.l.b16 %v214
    %v1074 = vunpack.c.l.b16 %v215
    %v1075 = vunpack.c.l.b16 %v216
    %v1076 = vunpack.c.l.b16 %v217
    %v1077 = vunpack.c.l.b16 %v218
    %v1078 = vunpack.c.l.b16 %v219
    %v1079 = vunpack.c.l.b16 %v220
    %v1080 = vunpack.c.l.b16 %v221
    %v1081 = vunpack.c.l.b16 %v222
    %v1082 = vunpack.c.l.b16 %v223
    %v1083 = vunpack.c.l.b16 %v224
    %v1084 = vunpack.c.l.b16 %v225
    %v1085 = vunpack.c.l.b16 %v226
    %v1086 = vunpack.c.l.b16 %v227
    %v1087 = vunpack.c.l.b16 %v228
    %v1088 = vunpack.c.l.b16 %v229
    %v1089 = vunpack.c.l.b16 %v230
    %v1090 = vunpack.c.l.b16 %v231
    %v1091 = vunpack.c.l.b16 %v232
    %v1092 = vunpack.c.l.b16 %v233
    %v1093 = vunpack.c.l.b16 %v234
    %v1094 = vunpack.c.l.b16 %v235
    %v1095 = vunpack.c.l.b16 %v236
    %v1096 = vunpack.c.l.b16 %v237
    %v1097 = vunpack.c.l.b16 %v238
    %v1098 = vunpack.c.l.b16 %v239
    %v1099 = vunpack.c.l.b16 %v240
    %v1100 = vunpack.c.l.b16 %v241
    %v1101 = vunpack.c.l.b16 %v242
    %v1102 = vunpack.c.l.b16 %v243
    %v1103 = vunpack.c.l.b16 %v244
    %v1104 = vunpack.c.l.b16 %v245
    %v1105 = vunpack.c.l.b16 %v246
    %v1106 = vunpack.c.l.b16 %v247
    %v1107 = vunpack.c.l.b16 %v248
    %v1108 = vunpack.c.l.b16 %v249
    %v1109 = vunpack.c.l.b16 %v250
    %v1110 = vunpack.c.l.b16 %v251
    %v1111 = vunpack.c.l.b16 %v252
    %v1112 = vunpack.c.l.b16 %v253
    %v1113 = vunpack.c.l.b16 %v254
    %v1114 = vunpack.c.l.b16 %v255
    %v1115 = vunpack.c.l.b16 %v256
    %v1116 = vunpack.c.l.b16 %v257
    %v1117 = vunpack.c.l.b16 %v258
    %v1118 = vunpack.c.l.b16 %v259
    %v1119 = vunpack.c.l.b16 %v260
    %v1120 = vunpack.c.l.b16 %v261
    %v1121 = vunpack.c.l.b16 %v262
    %v1122 = vunpack.c.l.b16 %v263
    %v1123 = vunpack.c.l.b16 %v264
    %v1124 = vunpack.c.l.b16 %v265
    %v1125 = vunpack.c.l.b16 %v266
    %v1126 = vunpack.c.l.b16 %v267
    %v1127 = vunpack.c.l.b16 %v268
    %v1128 = vunpack.c.l.b16 %v269
    %v1129 = vunpack.c.l.b16 %v270
    %v1130 = vunpack.c.l.b16 %v271
    %v1131 = vunpack.c.l.b16 %v272
    %v1132 = vunpack.c.l.b16 %v273
    %v1133 = vunpack.c.l.b16 %v274
    %v1134 = vunpack.c.l.b16 %v275
    %v1135 = vunpack.c.l.b16 %v276
    %v1136 = vunpack.c.l.b16 %v277
    %v1137 = vunpack.c.l.b16 %v278
    %v1138 = vunpack.c.l.b16 %v279
    %v1139 = vunpack.c.l.b16 %v280
    %v1140 = vunpack.c.l.b16 %v281
    %v1141 = vunpack.c.l.b16 %v282
    %v1142 = vunpack.c.l.b16 %v283
    %v1143 = vunpack.c.l.b16 %v284
    %v1144 = vunpack.c.l.b16 %v285
    %v1145 = vunpack.c.l.b16 %v286
    %v1146 = vunpack.c.l.b16 %v287
    %v1147 = vunpack.c.l.b16 %v288
    %v1148 = vunpack.c.l.b16 %v289
    %v1149 = vunpack.c.l.b16 %v290
    %v1150 = vunpack.c.l.b16 %v291
    %v1151 = vunpack.c.l.b16 %v292
    %v1152 = vunpack.c.l.b16 %v293
    %v1153 = vunpack.c.l.b16 %v294
    %v1154 = vunpack.c.l.b16 %v295
    %v1155 = vunpack.c.l.b16 %v296
    %v1156 = vunpack.c.l.b16 %v297
    %v1157 = vunpack.c.l.b16 %v298
    %v1158 = vunpack.c.l.b16 %v299
    %v1159 = vunpack.c.l.b16 %v300
    %v1160 = vunpack.c.l.b16 %v301
    %v1161 = vunpack.c.l.b16 %v302
    %v1162 = vunpack.c.l.b16 %v303
    %v1163 = vunpack.c.l.b16 %v304
    %v1164 = vunpack.c.l.b16 %v305
    %v1165 = vunpack.c.l.b16 %v306
    %v1166 = vunpack.c.l.b16 %v307
    %v1167 = vunpack.c.l.b16 %v308
    %v1168 = vunpack.c.l.b16 %v309
    %v1169 = vunpack.c.l.b16 %v310
    %v1170 = vunpack.c.l.b16 %v311
    %v1171 = vunpack.c.l.b16 %v312
    %v1172 = vunpack.c.l.b16 %v313
    %v1173 = vunpack.c.l.b16 %v314
    %v1174 = vunpack.c.l.b16 %v315
    %v1175 = vunpack.c.l.b16 %v316
    %v1176 = vunpack.c.l.b16 %v317
    %v1177 = vunpack.c.l.b16 %v318
    %v1178 = vunpack.c.l.b16 %v319
    %v1179 = vunpack.c.l.b16 %v320
    %v1180 = vunpack.c.l.b16 %v321
    %v1181 = vunpack.c.l.b16 %v322
    %v1182 = vunpack.c.l.b16 %v323
    %v1183 = vunpack.c.l.b16 %v324
    %v1184 = vunpack.c.l.b16 %v325
    %v1185 = vunpack.c.l.b16 %v326
    %v1186 = vunpack.c.l.b16 %v327
    %v1187 = vunpack.c.l.b16 %v328
    %v1188 = vunpack.c.l.b16 %v329
    %v1189 = vunpack.c.l.b16 %v330
    %v1190 = vunpack.c.l.b16 %v331
    %v1191 = vunpack.c.l.b16 %v332
    %v1192 = vunpack.c.l.b16 %v333
    %v1193 = vunpack.c.l.b16 %v334
    %v1194 = vunpack.c.l.b16 %v335
    %v1195 = vunpack.c.l.b16 %v336
    %v1196 = vunpack.c.l.b16 %v337
    %v1197 = vunpack.c.l.b16 %v338
    %v1198 = vunpack.c.l.b16 %v339
    %v1199 = vunpack.c.l.b16 %v340
    %v1200 = vunpack.c.l.b16 %v341
    %v1201 = vunpack.c.l.b16 %v342
    %v1202 = vunpack.c.l.b16 %v343
    %v1203 = vunpack.c.l.b16 %v344
    %v1204 = vunpack.c.l.b16 %v345
    %v1205 = vunpack.c.l.b16 %v346
    %v1206 = vunpack.c.l.b16 %v347
    %v1207 = vunpack.c.l.b16 %v348
    %v1208 = vunpack.c.l.b16 %v349
    %v1209 = vunpack.c.l.b16 %v350
    %v1210 = vunpack.c.l.b16 %v351
    %v1211 = vunpack.c.l.b16 %v352
    %v1212 = vunpack.c.l.b16 %v353
    %v1213 = vunpack.c.l.b16 %v354
    %v1214 = vunpack.c.l.b16 %v355
    %v1215 = vunpack.c.l.b16 %v356
    %v1216 = vunpack.c.l.b16 %v357
    %v1217 = vunpack.c.l.b16 %v358
    %v1218 = vunpack.c.l.b16 %v359
    %v1219 = vunpack.c.l.b16 %v360
    %v1220 = vunpack.c.l.b16 %v361
    %v1221 = vunpack.c.l.b16 %v362
    %v1222 = vunpack.c.l.b16 %v363
    %v1223 = vunpack.c.l.b16 %v364
    %v1224 = vunpack.c.l.b16 %v365
    %v1225 = vunpack.c.l.b16 %v366
    %v1226 = vunpack.c.l.b16 %v367
    %v1227 = vunpack.c.l.b16 %v368
    %v1228 = vunpack.c.l.b16 %v369
    %v1229 = vunpack.c.l.b16 %v370
    %v1230 = vunpack.c.l.b16 %v371
    %v1231 = vunpack.c.l.b16 %v372
    %v1232 = vunpack.c.l.b16 %v373
    %v1233 = vunpack.c.l.b16 %v374
    %v1234 = vunpack.c.l.b16 %v375
    %v1235 = vunpack.c.l.b16 %v376
    %v1236 = vunpack.c.l.b16 %v377
    %v1237 = vunpack.c.l.b16 %v378
    %v1238 = vunpack.c.l.b16 %v379
    %v1239 = vunpack.c.l.b16 %v380
    %v1240 = vunpack.c.l.b16 %v381
    %v1241 = vunpack.c.l.b16 %v382
    %v1242 = vunpack.c.l.b16 %v383
    %v1243 = vunpack.c.l.b16 %v384
    %v1244 = vunpack.c.l.b16 %v385
    %v1245 = vunpack.c.l.b16 %v386
    %v1246 = vunpack.c.l.b16 %v387
    %v1247 = vunpack.c.l.b16 %v388
    %v1248 = vunpack.c.l.b16 %v389
    %v1249 = vunpack.c.l.b16 %v390
    %v1250 = vunpack.c.l.b16 %v391
    %v1251 = vunpack.c.l.b16 %v392
    %v1252 = vunpack.c.l.b16 %v393
    %v1253 = vunpack.c.l.b16 %v394
    %v1254 = vunpack.c.l.b16 %v395
    %v1255 = vunpack.c.l.b16 %v396
    %v1256 = vunpack.c.l.b16 %v397
    %v1257 = vunpack.c.l.b16 %v398
    %v1258 = vunpack.c.l.b16 %v399
    %v1259 = vunpack.c.l.b16 %v400
    %v1260 = vunpack.c.l.b16 %v401
    %v1261 = vunpack.c.l.b16 %v402
    %v1262 = vunpack.c.l.b16 %v403
    %v1263 = vunpack.c.l.b16 %v404
    %v1264 = vunpack.c.l.b16 %v405
    %v1265 = vunpack.c.l.b16 %v406
    %v1266 = vunpack.c.l.b16 %v407
    %v1267 = vunpack.c.l.b16 %v408
    %v1268 = vunpack.c.l.b16 %v409
    %v1269 = vunpack.c.l.b16 %v410
    %v1270 = vunpack.c.l.b16 %v411
    %v1271 = vunpack.c.l.b16 %v412
    %v1272 = vunpack.c.l.b16 %v413
    %v1273 = vunpack.c.l.b16 %v414
    %v1274 = vunpack.c.l.b16 %v415
    %v1275 = vunpack.c.l.b16 %v416
    %v1276 = vunpack.c.l.b16 %v417
    %v1277 = vunpack.c.l.b16 %v418
    %v1278 = vunpack.c.l.b16 %v419
    %v1279 = vunpack.c.l.b16 %v420
    %v1280 = vunpack.c.l.b16 %v421
    %v1281 = vunpack.c.l.b16 %v422
    %v1282 = vunpack.c.l.b16 %v423
    %v1283 = vunpack.c.l.b16 %v424
    %v1284 = vunpack.c.l.b16 %v425
    %v1285 = vunpack.c.l.b16 %v426
    %v1286 = vpack.c.b16 %v903, %v902
    %v1287 = vpack.c.b16 %v905, %v904
    %v1288 = vpack.c.b16 %v907, %v906
    %v1289 = vpack.c.b16 %v909, %v908
    %v1290 = vpack.c.b16 %v911, %v910
    %v1291 = vpack.c.b16 %v913, %v912
    %v1292 = vpack.c.b16 %v915, %v914
    %v1293 = vpack.c.b16 %v917, %v916
    %v1294 = vpack.c.b16 %v919, %v918
    %v1295 = vpack.c.b16 %v921, %v920
    %v1296 = vpack.c.b16 %v923, %v922
    %v1297 = vpack.c.b16 %v925, %v924
    %v1298 = vpack.c.b16 %v927, %v926
    %v1299 = vpack.c.b16 %v929, %v928
    %v1300 = vpack.c.b16 %v931, %v930
    %v1301 = vpack.c.b16 %v933, %v932
    %v1302 = vpack.c.b16 %v935, %v934
    %v1303 = vpack.c.b16 %v937, %v936
    %v1304 = vpack.c.b16 %v939, %v938
    %v1305 = vpack.c.b16 %v941, %v940
    %v1306 = vpack.c.b16 %v943, %v942
    %v1307 = vpack.c.b16 %v945, %v944
    %v1308 = vpack.c.b16 %v947, %v946
    %v1309 = vpack.c.b16 %v949, %v948
    %v1310 = vpack.c.b16 %v951, %v950
    %v1311 = vpack.c.b16 %v953, %v952
    %v1312 = vpack.c.b16 %v955, %v954
    %v1313 = vpack.c.b16 %v957, %v956
    %v1314 = vpack.c.b16 %v959, %v958
    %v1315 = vpack.c.b16 %v961, %v960
    %v1316 = vpack.c.b16 %v963, %v962
    %v1317 = vpack.c.b16 %v965, %v964
    %v1318 = vpack.c.b16 %v967, %v966
    %v1319 = vpack.c.b16 %v969, %v968
    %v1320 = vpack.c.b16 %v971, %v970
    %v1321 = vpack.c.b16 %v973, %v972
    %v1322 = vpack.c.b16 %v975, %v974
    %v1323 = vpack.c.b16 %v977, %v976
    %v1324 = vpack.c.b16 %v979, %v978
    %v1325 = vpack.c.b16 %v981, %v980
    %v1326 = vpack.c.b16 %v983, %v982
    %v1327 = vpack.c.b16 %v985, %v984
    %v1328 = vpack.c.b16 %v987, %v986
    %v1329 = vpack.c.b16 %v989, %v988
    %v1330 = vpack.c.b16 %v991, %v990
    %v1331 = vpack.c.b16 %v993, %v992
    %v1332 = vpack.c.b16 %v995, %v994
    %v1333 = vpack.c.b16 %v997, %v996
    %v1334 = vpack.c.b16 %v999, %v998
    %v1335 = vpack.c.b16 %v1001, %v1000
    %v1336 = vpack.c.b16 %v1003, %v1002
    %v1337 = vpack.c.b16 %v1005, %v1004
    %v1338 = vpack.c.b16 %v1007, %v1006
    %v1339 = vpack.c.b16 %v1009, %v1008
    %v1340 = vpack.c.b16 %v1011, %v1010
    %v1341 = vpack.c.b16 %v1013, %v1012
    %v1342 = vpack.c.b16 %v1015, %v1014
    %v1343 = vpack.c.b16 %v1017, %v1016
    %v1344 = vpack.c.b16 %v1019, %v1018
    %v1345 = vpack.c.b16 %v1021, %v1020
    %v1346 = vpack.c.b16 %v1023, %v1022
    %v1347 = vpack.c.b16 %v1025, %v1024
    %v1348 = vpack.c.b16 %v1027, %v1026
    %v1349 = vpack.c.b16 %v1029, %v1028
    %v1350 = vpack.c.b16 %v1031, %v1030
    %v1351 = vpack.c.b16 %v1033, %v1032
    %v1352 = vpack.c.b16 %v1035, %v1034
    %v1353 = vpack.c.b16 %v1037, %v1036
    %v1354 = vpack.c.b16 %v1039, %v1038
    %v1355 = vpack.c.b16 %v1041, %v1040
    %v1356 = vpack.c.b16 %v1043, %v1042
    %v1357 = vpack.c.b16 %v1045, %v1044
    %v1358 = vpack.c.b16 %v1047, %v1046
    %v1359 = vpack.c.b16 %v1049, %v1048
    %v1360 = vpack.c.b16 %v1051, %v1050
    %v1361 = vpack.c.b16 %v1053, %v1052
    %v1362 = vpack.c.b16 %v1055, %v1054
    %v1363 = vpack.c.b16 %v1057, %v1056
    %v1364 = vpack.c.b16 %v1059, %v1058
    %v1365 = vpack.c.b16 %v1061, %v1060
    %v1366 = vpack.c.b16 %v1063, %v1062
    %v1367 = vpack.c.b16 %v1065, %v1064
    %v1368 = vpack.c.b16 %v1067, %v1066
    %v1369 = vpack.c.b16 %v1069, %v1068
    %v1370 = vpack.c.b16 %v1071, %v1070
    %v1371 = vpack.c.b16 %v1073, %v1072
    %v1372 = vpack.c.b16 %v1075, %v1074
    %v1373 = vpack.c.b16 %v1077, %v1076
    %v1374 = vpack.c.b16 %v1079, %v1078
    %v1375 = vpack.c.b16 %v1081, %v1080
    %v1376 = vpack.c.b16 %v1083, %v1082
    %v1377 = vpack.c.b16 %v1085, %v1084
    %v1378 = vpack.c.b16 %v1087, %v1086
    %v1379 = vpack.c.b16 %v1089, %v1088
    %v1380 = vpack.c.b16 %v1091, %v1090
    %v1381 = vpack.c.b16 %v1093, %v1092
    %v1382 = vpack.c.b16 %v1095, %v1094
    %v1383 = vpack.c.b16 %v1097, %v1096
    %v1384 = vpack.c.b16 %v1099, %v1098
    %v1385 = vpack.c.b16 %v1101, %v1100
    %v1386 = vpack.c.b16 %v1103, %v1102
    %v1387 = vpack.c.b16 %v1105, %v1104
    %v1388 = vpack.c.b16 %v1107, %v1106
    %v1389 = vpack.c.b16 %v1109, %v1108
    %v1390 = vpack.c.b16 %v1111, %v1110
    %v1391 = vpack.c.b16 %v1113, %v1112
    %v1392 = vpack.c.b16 %v1115, %v1114
    %v1393 = vpack.c.b16 %v1117, %v1116
    %v1394 = vpack.c.b16 %v1119, %v1118
    %v1395 = vpack.c.b16 %v1121, %v1120
    %v1396 = vpack.c.b16 %v1123, %v1122
    %v1397 = vpack.c.b16 %v1125, %v1124
    %v1398 = vpack.c.b16 %v1127, %v1126
    %v1399 = vpack.c.b16 %v1129, %v1128
    %v1400 = vpack.c.b16 %v1131, %v1130
    %v1401 = vpack.c.b16 %v1133, %v1132
    %v1402 = vpack.c.b16 %v1135, %v1134
    %v1403 = vpack.c.b16 %v1137, %v1136
    %v1404 = vpack.c.b16 %v1139, %v1138
    %v1405 = vpack.c.b16 %v1141, %v1140
    %v1406 = vpack.c.b16 %v1143, %v1142
    %v1407 = vpack.c.b16 %v1145, %v1144
    %v1408 = vpack.c.b16 %v1147, %v1146
    %v1409 = vpack.c.b16 %v1149, %v1148
    %v1410 = vpack.c.b16 %v1151, %v1150
    %v1411 = vpack.c.b16 %v1153, %v1152
    %v1412 = vpack.c.b16 %v1155, %v1154
    %v1413 = vpack.c.b16 %v1157, %v1156
    %v1414 = vpack.c.b16 %v1159, %v1158
    %v1415 = vpack.c.b16 %v1161, %v1160
    %v1416 = vpack.c.b16 %v1163, %v1162
    %v1417 = vpack.c.b16 %v1165, %v1164
    %v1418 = vpack.c.b16 %v1167, %v1166
    %v1419 = vpack.c.b16 %v1169, %v1168
    %v1420 = vpack.c.b16 %v1171, %v1170
    %v1421 = vpack.c.b16 %v1173, %v1172
    %v1422 = vpack.c.b16 %v1175, %v1174
    %v1423 = vpack.c.b16 %v1177, %v1176
    %v1424 = vpack.c.b16 %v1179, %v1178
    %v1425 = vpack.c.b16 %v1181, %v1180
    %v1426 = vpack.c.b16 %v1183, %v1182
    %v1427 = vpack.c.b16 %v1185, %v1184
    %v1428 = vpack.c.b16 %v1187, %v1186
    %v1429 = vpack.c.b16 %v1189, %v1188
    %v1430 = vpack.c.b16 %v1191, %v1190
    %v1431 = vpack.c.b16 %v1193, %v1192
    %v1432 = vpack.c.b16 %v1195, %v1194
    %v1433 = vpack.c.b16 %v1197, %v1196
    %v1434 = vpack.c.b16 %v1199, %v1198
    %v1435 = vpack.c.b16 %v1201, %v1200
    %v1436 = vpack.c.b16 %v1203, %v1202
    %v1437 = vpack.c.b16 %v1205, %v1204
    %v1438 = vpack.c.b16 %v1207, %v1206
    %v1439 = vpack.c.b16 %v1209, %v1208
    %v1440 = vpack.c.b16 %v1211, %v1210
    %v1441 = vpack.c.b16 %v1213, %v1212
    %v1442 = vpack.c.b16 %v1215, %v1214
    %v1443 = vpack.c.b16 %v1217, %v1216
    %v1444 = vpack.c.b16 %v1219, %v1218
    %v1445 = vpack.c.b16 %v1221, %v1220
    %v1446 = vpack.c.b16 %v1223, %v1222
    %v1447 = vpack.c.b16 %v1225, %v1224
    %v1448 = vpack.c.b16 %v1227, %v1226
    %v1449 = vpack.c.b16 %v1229, %v1228
    %v1450 = vpack.c.b16 %v1231, %v1230
    %v1451 = vpack.c.b16 %v1233, %v1232
    %v1452 = vpack.c.b16 %v1235, %v1234
    %v1453 = vpack.c.b16 %v1237, %v1236
    %v1454 = vpack.c.b16 %v1239, %v1238
    %v1455 = vpack.c.b16 %v1241, %v1240
    %v1456 = vpack.c.b16 %v1243, %v1242
    %v1457 = vpack.c.b16 %v1245, %v1244
    %v1458 = vpack.c.b16 %v1247, %v1246
    %v1459 = vpack.c.b16 %v1249, %v1248
    %v1460 = vpack.c.b16 %v1251, %v1250
    %v1461 = vpack.c.b16 %v1253, %v1252
    %v1462 = vpack.c.b16 %v1255, %v1254
    %v1463 = vpack.c.b16 %v1257, %v1256
    %v1464 = vpack.c.b16 %v1259, %v1258
    %v1465 = vpack.c.b16 %v1261, %v1260
    %v1466 = vpack.c.b16 %v1263, %v1262
    %v1467 = vpack.c.b16 %v1265, %v1264
    %v1468 = vpack.c.b16 %v1267, %v1266
    %v1469 = vpack.c.b16 %v1269, %v1268
    %v1470 = vpack.c.b16 %v1271, %v1270
    %v1471 = vpack.c.b16 %v1273, %v1272
    %v1472 = vpack.c.b16 %v1275, %v1274
    %v1473 = vpack.c.b16 %v1277, %v1276
    %v1474 = vpack.c.b16 %v1279, %v1278
    %v1475 = vpack.c.b16 %v1281, %v1280
    %v1476 = vpack.c.b16 %v1283, %v1282
    %v1477 = vpack.c.b16 %v1285, %v1284
    %1670 = vmatprep.subr.bf16.mxu0 0
    %1671 = vmatpush1.bf16.msra.mxu0 %v1293
    %1672 = vmatprep.subr.bf16.mxu0 0
    %1673 = vmatpush1.bf16.msra.mxu0 %v1292
    %1674 = vmatprep.subr.bf16.mxu0 0
    %1675 = vmatpush1.bf16.msra.mxu0 %v1291
    %1676 = vmatprep.subr.bf16.mxu0 0
    %1677 = vmatpush1.bf16.msra.mxu0 %v1290
    %1678 = vmatprep.subr.bf16.mxu0 0
    %1679 = vmatpush1.bf16.msra.mxu0 %v1289
    %1680 = vmatprep.subr.bf16.mxu0 0
    %1681 = vmatpush1.bf16.msra.mxu0 %v1288
    %1682 = vmatprep.subr.bf16.mxu0 0
    %1683 = vmatpush1.bf16.msra.mxu0 %v1287
    %1684 = vmatprep.subr.bf16.mxu0 0
    %1685 = vmatpush1.bf16.msra.mxu0 %v1286
    %1686 = vmatprep.subr.bf16.mxu0 0
    %1687 = vmatpush2.bf16.msra.mxu0 %v1301
    %1688 = vmatprep.subr.bf16.mxu0 0
    %1689 = vmatpush2.bf16.msra.mxu0 %v1300
    %1690 = vmatprep.subr.bf16.mxu0 0
    %1691 = vmatpush2.bf16.msra.mxu0 %v1299
    %1692 = vmatprep.subr.bf16.mxu0 0
    %1693 = vmatpush2.bf16.msra.mxu0 %v1298
    %1694 = vmatprep.subr.bf16.mxu0 0
    %1695 = vmatpush2.bf16.msra.mxu0 %v1297
    %1696 = vmatprep.subr.bf16.mxu0 0
    %1697 = vmatpush2.bf16.msra.mxu0 %v1296
    %1698 = vmatprep.subr.bf16.mxu0 0
    %1699 = vmatpush2.bf16.msra.mxu0 %v1295
    %1700 = vmatprep.subr.bf16.mxu0 0
    %1701 = vmatpush2.bf16.msra.mxu0 %v1294
    %1702 = vmatprep.mubr.bf16.mxu0 %v471
    %1703 = vmatmul.mubr.bf16.gmra.mxu0 %v470
    %v1704 = vpop.f32.mrf.mxu0
    %v1705 = vadd.f32 %v432, %v1704
    %v1706 = vpop.f32.mrf.mxu0
    %v1707 = vpop.f32.mrf.mxu0
    %v1708 = vpop.f32.mrf.mxu0
    %1709 = vdwg.mxu0
    %1710 = vmatprep.subr.bf16.mxu0 0
    %1711 = vmatpush1.bf16.msra.mxu0 %v1309
    %1712 = vmatprep.subr.bf16.mxu0 0
    %1713 = vmatpush1.bf16.msra.mxu0 %v1308
    %1714 = vmatprep.subr.bf16.mxu0 0
    %1715 = vmatpush1.bf16.msra.mxu0 %v1307
    %1716 = vmatprep.subr.bf16.mxu0 0
    %1717 = vmatpush1.bf16.msra.mxu0 %v1306
    %1718 = vmatprep.subr.bf16.mxu0 0
    %1719 = vmatpush1.bf16.msra.mxu0 %v1305
    %1720 = vmatprep.subr.bf16.mxu0 0
    %1721 = vmatpush1.bf16.msra.mxu0 %v1304
    %1722 = vmatprep.subr.bf16.mxu0 0
    %1723 = vmatpush1.bf16.msra.mxu0 %v1303
    %1724 = vmatprep.subr.bf16.mxu0 0
    %1725 = vmatpush1.bf16.msra.mxu0 %v1302
    %1726 = vmatprep.subr.bf16.mxu0 0
    %1727 = vmatpush2.bf16.msra.mxu0 %v1317
    %1728 = vmatprep.subr.bf16.mxu0 0
    %1729 = vmatpush2.bf16.msra.mxu0 %v1316
    %1730 = vmatprep.subr.bf16.mxu0 0
    %1731 = vmatpush2.bf16.msra.mxu0 %v1315
    %1732 = vmatprep.subr.bf16.mxu0 0
    %1733 = vmatpush2.bf16.msra.mxu0 %v1314
    %1734 = vmatprep.subr.bf16.mxu0 0
    %1735 = vmatpush2.bf16.msra.mxu0 %v1313
    %1736 = vmatprep.subr.bf16.mxu0 0
    %1737 = vmatpush2.bf16.msra.mxu0 %v1312
    %1738 = vmatprep.subr.bf16.mxu0 0
    %1739 = vmatpush2.bf16.msra.mxu0 %v1311
    %1740 = vmatprep.subr.bf16.mxu0 0
    %1741 = vmatpush2.bf16.msra.mxu0 %v1310
    %1742 = vmatprep.mubr.bf16.mxu0 %v473
    %1743 = vmatmul.mubr.bf16.gmra.mxu0 %v472
    %v1744 = vpop.f32.mrf.mxu0
    %v1745 = vadd.f32 %v1705, %v1744
    %v1746 = vpop.f32.mrf.mxu0
    %v1747 = vpop.f32.mrf.mxu0
    %v1748 = vpop.f32.mrf.mxu0
    %1749 = vdwg.mxu0
    %1750 = vmatprep.subr.bf16.mxu0 0
    %1751 = vmatpush1.bf16.msra.mxu0 %v1325
    %1752 = vmatprep.subr.bf16.mxu0 0
    %1753 = vmatpush1.bf16.msra.mxu0 %v1324
    %1754 = vmatprep.subr.bf16.mxu0 0
    %1755 = vmatpush1.bf16.msra.mxu0 %v1323
    %1756 = vmatprep.subr.bf16.mxu0 0
    %1757 = vmatpush1.bf16.msra.mxu0 %v1322
    %1758 = vmatprep.subr.bf16.mxu0 0
    %1759 = vmatpush1.bf16.msra.mxu0 %v1321
    %1760 = vmatprep.subr.bf16.mxu0 0
    %1761 = vmatpush1.bf16.msra.mxu0 %v1320
    %1762 = vmatprep.subr.bf16.mxu0 0
    %1763 = vmatpush1.bf16.msra.mxu0 %v1319
    %1764 = vmatprep.subr.bf16.mxu0 0
    %1765 = vmatpush1.bf16.msra.mxu0 %v1318
    %1766 = vmatprep.subr.bf16.mxu0 0
    %1767 = vmatpush2.bf16.msra.mxu0 %v1333
    %1768 = vmatprep.subr.bf16.mxu0 0
    %1769 = vmatpush2.bf16.msra.mxu0 %v1332
    %1770 = vmatprep.subr.bf16.mxu0 0
    %1771 = vmatpush2.bf16.msra.mxu0 %v1331
    %1772 = vmatprep.subr.bf16.mxu0 0
    %1773 = vmatpush2.bf16.msra.mxu0 %v1330
    %1774 = vmatprep.subr.bf16.mxu0 0
    %1775 = vmatpush2.bf16.msra.mxu0 %v1329
    %1776 = vmatprep.subr.bf16.mxu0 0
    %1777 = vmatpush2.bf16.msra.mxu0 %v1328
    %1778 = vmatprep.subr.bf16.mxu0 0
    %1779 = vmatpush2.bf16.msra.mxu0 %v1327
    %1780 = vmatprep.subr.bf16.mxu0 0
    %1781 = vmatpush2.bf16.msra.mxu0 %v1326
    %1782 = vmatprep.mubr.bf16.mxu0 %v475
    %1783 = vmatmul.mubr.bf16.gmra.mxu0 %v474
    %v1784 = vpop.f32.mrf.mxu0
    %v1785 = vadd.f32 %v1745, %v1784
    %v1786 = vpop.f32.mrf.mxu0
    %v1787 = vpop.f32.mrf.mxu0
    %v1788 = vpop.f32.mrf.mxu0
    %1789 = vdwg.mxu0
    %1790 = vmatprep.subr.bf16.mxu0 0
    %1791 = vmatpush1.bf16.msra.mxu0 %v1341
    %1792 = vmatprep.subr.bf16.mxu0 0
    %1793 = vmatpush1.bf16.msra.mxu0 %v1340
    %1794 = vmatprep.subr.bf16.mxu0 0
    %1795 = vmatpush1.bf16.msra.mxu0 %v1339
    %1796 = vmatprep.subr.bf16.mxu0 0
    %1797 = vmatpush1.bf16.msra.mxu0 %v1338
    %1798 = vmatprep.subr.bf16.mxu0 0
    %1799 = vmatpush1.bf16.msra.mxu0 %v1337
    %1800 = vmatprep.subr.bf16.mxu0 0
    %1801 = vmatpush1.bf16.msra.mxu0 %v1336
    %1802 = vmatprep.subr.bf16.mxu0 0
    %1803 = vmatpush1.bf16.msra.mxu0 %v1335
    %1804 = vmatprep.subr.bf16.mxu0 0
    %1805 = vmatpush1.bf16.msra.mxu0 %v1334
    %1806 = vmatprep.subr.bf16.mxu0 0
    %1807 = vmatpush2.bf16.msra.mxu0 %v1349
    %1808 = vmatprep.subr.bf16.mxu0 0
    %1809 = vmatpush2.bf16.msra.mxu0 %v1348
    %1810 = vmatprep.subr.bf16.mxu0 0
    %1811 = vmatpush2.bf16.msra.mxu0 %v1347
    %1812 = vmatprep.subr.bf16.mxu0 0
    %1813 = vmatpush2.bf16.msra.mxu0 %v1346
    %1814 = vmatprep.subr.bf16.mxu0 0
    %1815 = vmatpush2.bf16.msra.mxu0 %v1345
    %1816 = vmatprep.subr.bf16.mxu0 0
    %1817 = vmatpush2.bf16.msra.mxu0 %v1344
    %1818 = vmatprep.subr.bf16.mxu0 0
    %1819 = vmatpush2.bf16.msra.mxu0 %v1343
    %1820 = vmatprep.subr.bf16.mxu0 0
    %1821 = vmatpush2.bf16.msra.mxu0 %v1342
    %1822 = vmatprep.mubr.bf16.mxu0 %v477
    %1823 = vmatmul.mubr.bf16.gmra.mxu0 %v476
    %v1824 = vpop.f32.mrf.mxu0
    %v1825 = vadd.f32 %v1785, %v1824
    %v1826 = vpop.f32.mrf.mxu0
    %v1827 = vpop.f32.mrf.mxu0
    %v1828 = vpop.f32.mrf.mxu0
    %1829 = vdwg.mxu0
    %1830 = vmatprep.subr.bf16.mxu0 0
    %1831 = vmatpush1.bf16.msra.mxu0 %v1357
    %1832 = vmatprep.subr.bf16.mxu0 0
    %1833 = vmatpush1.bf16.msra.mxu0 %v1356
    %1834 = vmatprep.subr.bf16.mxu0 0
    %1835 = vmatpush1.bf16.msra.mxu0 %v1355
    %1836 = vmatprep.subr.bf16.mxu0 0
    %1837 = vmatpush1.bf16.msra.mxu0 %v1354
    %1838 = vmatprep.subr.bf16.mxu0 0
    %1839 = vmatpush1.bf16.msra.mxu0 %v1353
    %1840 = vmatprep.subr.bf16.mxu0 0
    %1841 = vmatpush1.bf16.msra.mxu0 %v1352
    %1842 = vmatprep.subr.bf16.mxu0 0
    %1843 = vmatpush1.bf16.msra.mxu0 %v1351
    %1844 = vmatprep.subr.bf16.mxu0 0
    %1845 = vmatpush1.bf16.msra.mxu0 %v1350
    %1846 = vmatprep.subr.bf16.mxu0 0
    %1847 = vmatpush2.bf16.msra.mxu0 %v1365
    %1848 = vmatprep.subr.bf16.mxu0 0
    %1849 = vmatpush2.bf16.msra.mxu0 %v1364
    %1850 = vmatprep.subr.bf16.mxu0 0
    %1851 = vmatpush2.bf16.msra.mxu0 %v1363
    %1852 = vmatprep.subr.bf16.mxu0 0
    %1853 = vmatpush2.bf16.msra.mxu0 %v1362
    %1854 = vmatprep.subr.bf16.mxu0 0
    %1855 = vmatpush2.bf16.msra.mxu0 %v1361
    %1856 = vmatprep.subr.bf16.mxu0 0
    %1857 = vmatpush2.bf16.msra.mxu0 %v1360
    %1858 = vmatprep.subr.bf16.mxu0 0
    %1859 = vmatpush2.bf16.msra.mxu0 %v1359
    %1860 = vmatprep.subr.bf16.mxu0 0
    %1861 = vmatpush2.bf16.msra.mxu0 %v1358
    %1862 = vmatprep.mubr.bf16.mxu0 %v479
    %1863 = vmatmul.mubr.bf16.gmra.mxu0 %v478
    %v1864 = vpop.f32.mrf.mxu0
    %v1865 = vadd.f32 %v1825, %v1864
    %v1866 = vpop.f32.mrf.mxu0
    %v1867 = vpop.f32.mrf.mxu0
    %v1868 = vpop.f32.mrf.mxu0
    %1869 = vdwg.mxu0
    %1870 = vmatprep.subr.bf16.mxu0 0
    %1871 = vmatpush1.bf16.msra.mxu0 %v1373
    %1872 = vmatprep.subr.bf16.mxu0 0
    %1873 = vmatpush1.bf16.msra.mxu0 %v1372
    %1874 = vmatprep.subr.bf16.mxu0 0
    %1875 = vmatpush1.bf16.msra.mxu0 %v1371
    %1876 = vmatprep.subr.bf16.mxu0 0
    %1877 = vmatpush1.bf16.msra.mxu0 %v1370
    %1878 = vmatprep.subr.bf16.mxu0 0
    %1879 = vmatpush1.bf16.msra.mxu0 %v1369
    %1880 = vmatprep.subr.bf16.mxu0 0
    %1881 = vmatpush1.bf16.msra.mxu0 %v1368
    %1882 = vmatprep.subr.bf16.mxu0 0
    %1883 = vmatpush1.bf16.msra.mxu0 %v1367
    %1884 = vmatprep.subr.bf16.mxu0 0
    %1885 = vmatpush1.bf16.msra.mxu0 %v1366
    %1886 = vmatprep.subr.bf16.mxu0 0
    %1887 = vmatpush2.bf16.msra.mxu0 %v1381
    %1888 = vmatprep.subr.bf16.mxu0 0
    %1889 = vmatpush2.bf16.msra.mxu0 %v1380
    %1890 = vmatprep.subr.bf16.mxu0 0
    %1891 = vmatpush2.bf16.msra.mxu0 %v1379
    %1892 = vmatprep.subr.bf16.mxu0 0
    %1893 = vmatpush2.bf16.msra.mxu0 %v1378
    %1894 = vmatprep.subr.bf16.mxu0 0
    %1895 = vmatpush2.bf16.msra.mxu0 %v1377
    %1896 = vmatprep.subr.bf16.mxu0 0
    %1897 = vmatpush2.bf16.msra.mxu0 %v1376
    %1898 = vmatprep.subr.bf16.mxu0 0
    %1899 = vmatpush2.bf16.msra.mxu0 %v1375
    %1900 = vmatprep.subr.bf16.mxu0 0
    %1901 = vmatpush2.bf16.msra.mxu0 %v1374
    %1902 = vmatprep.mubr.bf16.mxu0 %v481
    %1903 = vmatmul.mubr.bf16.gmra.mxu0 %v480
    %v1904 = vpop.f32.mrf.mxu0
    %v1905 = vadd.f32 %v1865, %v1904
    %v1906 = vpop.f32.mrf.mxu0
    %v1907 = vpop.f32.mrf.mxu0
    %v1908 = vpop.f32.mrf.mxu0
    %1909 = vdwg.mxu0
    %1910 = vmatprep.subr.bf16.mxu0 0
    %1911 = vmatpush1.bf16.msra.mxu0 %v1389
    %1912 = vmatprep.subr.bf16.mxu0 0
    %1913 = vmatpush1.bf16.msra.mxu0 %v1388
    %1914 = vmatprep.subr.bf16.mxu0 0
    %1915 = vmatpush1.bf16.msra.mxu0 %v1387
    %1916 = vmatprep.subr.bf16.mxu0 0
    %1917 = vmatpush1.bf16.msra.mxu0 %v1386
    %1918 = vmatprep.subr.bf16.mxu0 0
    %1919 = vmatpush1.bf16.msra.mxu0 %v1385
    %1920 = vmatprep.subr.bf16.mxu0 0
    %1921 = vmatpush1.bf16.msra.mxu0 %v1384
    %1922 = vmatprep.subr.bf16.mxu0 0
    %1923 = vmatpush1.bf16.msra.mxu0 %v1383
    %1924 = vmatprep.subr.bf16.mxu0 0
    %1925 = vmatpush1.bf16.msra.mxu0 %v1382
    %1926 = vmatprep.subr.bf16.mxu0 0
    %1927 = vmatpush2.bf16.msra.mxu0 %v1397
    %1928 = vmatprep.subr.bf16.mxu0 0
    %1929 = vmatpush2.bf16.msra.mxu0 %v1396
    %1930 = vmatprep.subr.bf16.mxu0 0
    %1931 = vmatpush2.bf16.msra.mxu0 %v1395
    %1932 = vmatprep.subr.bf16.mxu0 0
    %1933 = vmatpush2.bf16.msra.mxu0 %v1394
    %1934 = vmatprep.subr.bf16.mxu0 0
    %1935 = vmatpush2.bf16.msra.mxu0 %v1393
    %1936 = vmatprep.subr.bf16.mxu0 0
    %1937 = vmatpush2.bf16.msra.mxu0 %v1392
    %1938 = vmatprep.subr.bf16.mxu0 0
    %1939 = vmatpush2.bf16.msra.mxu0 %v1391
    %1940 = vmatprep.subr.bf16.mxu0 0
    %1941 = vmatpush2.bf16.msra.mxu0 %v1390
    %1942 = vmatprep.mubr.bf16.mxu0 %v483
    %1943 = vmatmul.mubr.bf16.gmra.mxu0 %v482
    %v1944 = vpop.f32.mrf.mxu0
    %v1945 = vadd.f32 %v1905, %v1944
    %v1946 = vpop.f32.mrf.mxu0
    %v1947 = vpop.f32.mrf.mxu0
    %v1948 = vpop.f32.mrf.mxu0
    %1949 = vdwg.mxu0
    %1950 = vmatprep.subr.bf16.mxu0 0
    %1951 = vmatpush1.bf16.msra.mxu0 %v1405
    %1952 = vmatprep.subr.bf16.mxu0 0
    %1953 = vmatpush1.bf16.msra.mxu0 %v1404
    %1954 = vmatprep.subr.bf16.mxu0 0
    %1955 = vmatpush1.bf16.msra.mxu0 %v1403
    %1956 = vmatprep.subr.bf16.mxu0 0
    %1957 = vmatpush1.bf16.msra.mxu0 %v1402
    %1958 = vmatprep.subr.bf16.mxu0 0
    %1959 = vmatpush1.bf16.msra.mxu0 %v1401
    %1960 = vmatprep.subr.bf16.mxu0 0
    %1961 = vmatpush1.bf16.msra.mxu0 %v1400
    %1962 = vmatprep.subr.bf16.mxu0 0
    %1963 = vmatpush1.bf16.msra.mxu0 %v1399
    %1964 = vmatprep.subr.bf16.mxu0 0
    %1965 = vmatpush1.bf16.msra.mxu0 %v1398
    %1966 = vmatprep.subr.bf16.mxu0 0
    %1967 = vmatpush2.bf16.msra.mxu0 %v1413
    %1968 = vmatprep.subr.bf16.mxu0 0
    %1969 = vmatpush2.bf16.msra.mxu0 %v1412
    %1970 = vmatprep.subr.bf16.mxu0 0
    %1971 = vmatpush2.bf16.msra.mxu0 %v1411
    %1972 = vmatprep.subr.bf16.mxu0 0
    %1973 = vmatpush2.bf16.msra.mxu0 %v1410
    %1974 = vmatprep.subr.bf16.mxu0 0
    %1975 = vmatpush2.bf16.msra.mxu0 %v1409
    %1976 = vmatprep.subr.bf16.mxu0 0
    %1977 = vmatpush2.bf16.msra.mxu0 %v1408
    %1978 = vmatprep.subr.bf16.mxu0 0
    %1979 = vmatpush2.bf16.msra.mxu0 %v1407
    %1980 = vmatprep.subr.bf16.mxu0 0
    %1981 = vmatpush2.bf16.msra.mxu0 %v1406
    %1982 = vmatprep.mubr.bf16.mxu0 %v485
    %1983 = vmatmul.mubr.bf16.gmra.mxu0 %v484
    %v1984 = vpop.f32.mrf.mxu0
    %v1985 = vadd.f32 %v1945, %v1984
    %v1986 = vpop.f32.mrf.mxu0
    %v1987 = vpop.f32.mrf.mxu0
    %v1988 = vpop.f32.mrf.mxu0
    %1989 = vdwg.mxu0
    %1990 = vmatprep.subr.bf16.mxu0 0
    %1991 = vmatpush1.bf16.msra.mxu0 %v1421
    %1992 = vmatprep.subr.bf16.mxu0 0
    %1993 = vmatpush1.bf16.msra.mxu0 %v1420
    %1994 = vmatprep.subr.bf16.mxu0 0
    %1995 = vmatpush1.bf16.msra.mxu0 %v1419
    %1996 = vmatprep.subr.bf16.mxu0 0
    %1997 = vmatpush1.bf16.msra.mxu0 %v1418
    %1998 = vmatprep.subr.bf16.mxu0 0
    %1999 = vmatpush1.bf16.msra.mxu0 %v1417
    %2000 = vmatprep.subr.bf16.mxu0 0
    %2001 = vmatpush1.bf16.msra.mxu0 %v1416
    %2002 = vmatprep.subr.bf16.mxu0 0
    %2003 = vmatpush1.bf16.msra.mxu0 %v1415
    %2004 = vmatprep.subr.bf16.mxu0 0
    %2005 = vmatpush1.bf16.msra.mxu0 %v1414
    %2006 = vmatprep.subr.bf16.mxu0 0
    %2007 = vmatpush2.bf16.msra.mxu0 %v1429
    %2008 = vmatprep.subr.bf16.mxu0 0
    %2009 = vmatpush2.bf16.msra.mxu0 %v1428
    %2010 = vmatprep.subr.bf16.mxu0 0
    %2011 = vmatpush2.bf16.msra.mxu0 %v1427
    %2012 = vmatprep.subr.bf16.mxu0 0
    %2013 = vmatpush2.bf16.msra.mxu0 %v1426
    %2014 = vmatprep.subr.bf16.mxu0 0
    %2015 = vmatpush2.bf16.msra.mxu0 %v1425
    %2016 = vmatprep.subr.bf16.mxu0 0
    %2017 = vmatpush2.bf16.msra.mxu0 %v1424
    %2018 = vmatprep.subr.bf16.mxu0 0
    %2019 = vmatpush2.bf16.msra.mxu0 %v1423
    %2020 = vmatprep.subr.bf16.mxu0 0
    %2021 = vmatpush2.bf16.msra.mxu0 %v1422
    %2022 = vmatprep.mubr.bf16.mxu0 %v487
    %2023 = vmatmul.mubr.bf16.gmra.mxu0 %v486
    %v2024 = vpop.f32.mrf.mxu0
    %v2025 = vadd.f32 %v1985, %v2024
    %v2026 = vpop.f32.mrf.mxu0
    %v2027 = vpop.f32.mrf.mxu0
    %v2028 = vpop.f32.mrf.mxu0
    %2029 = vdwg.mxu0
    %2030 = vmatprep.subr.bf16.mxu0 0
    %2031 = vmatpush1.bf16.msra.mxu0 %v1437
    %2032 = vmatprep.subr.bf16.mxu0 0
    %2033 = vmatpush1.bf16.msra.mxu0 %v1436
    %2034 = vmatprep.subr.bf16.mxu0 0
    %2035 = vmatpush1.bf16.msra.mxu0 %v1435
    %2036 = vmatprep.subr.bf16.mxu0 0
    %2037 = vmatpush1.bf16.msra.mxu0 %v1434
    %2038 = vmatprep.subr.bf16.mxu0 0
    %2039 = vmatpush1.bf16.msra.mxu0 %v1433
    %2040 = vmatprep.subr.bf16.mxu0 0
    %2041 = vmatpush1.bf16.msra.mxu0 %v1432
    %2042 = vmatprep.subr.bf16.mxu0 0
    %2043 = vmatpush1.bf16.msra.mxu0 %v1431
    %2044 = vmatprep.subr.bf16.mxu0 0
    %2045 = vmatpush1.bf16.msra.mxu0 %v1430
    %2046 = vmatprep.subr.bf16.mxu0 0
    %2047 = vmatpush2.bf16.msra.mxu0 %v1445
    %2048 = vmatprep.subr.bf16.mxu0 0
    %2049 = vmatpush2.bf16.msra.mxu0 %v1444
    %2050 = vmatprep.subr.bf16.mxu0 0
    %2051 = vmatpush2.bf16.msra.mxu0 %v1443
    %2052 = vmatprep.subr.bf16.mxu0 0
    %2053 = vmatpush2.bf16.msra.mxu0 %v1442
    %2054 = vmatprep.subr.bf16.mxu0 0
    %2055 = vmatpush2.bf16.msra.mxu0 %v1441
    %2056 = vmatprep.subr.bf16.mxu0 0
    %2057 = vmatpush2.bf16.msra.mxu0 %v1440
    %2058 = vmatprep.subr.bf16.mxu0 0
    %2059 = vmatpush2.bf16.msra.mxu0 %v1439
    %2060 = vmatprep.subr.bf16.mxu0 0
    %2061 = vmatpush2.bf16.msra.mxu0 %v1438
    %2062 = vmatprep.mubr.bf16.mxu0 %v489
    %2063 = vmatmul.mubr.bf16.gmra.mxu0 %v488
    %v2064 = vpop.f32.mrf.mxu0
    %v2065 = vadd.f32 %v2025, %v2064
    %v2066 = vpop.f32.mrf.mxu0
    %v2067 = vpop.f32.mrf.mxu0
    %v2068 = vpop.f32.mrf.mxu0
    %2069 = vdwg.mxu0
    %2070 = vmatprep.subr.bf16.mxu0 0
    %2071 = vmatpush1.bf16.msra.mxu0 %v1453
    %2072 = vmatprep.subr.bf16.mxu0 0
    %2073 = vmatpush1.bf16.msra.mxu0 %v1452
    %2074 = vmatprep.subr.bf16.mxu0 0
    %2075 = vmatpush1.bf16.msra.mxu0 %v1451
    %2076 = vmatprep.subr.bf16.mxu0 0
    %2077 = vmatpush1.bf16.msra.mxu0 %v1450
    %2078 = vmatprep.subr.bf16.mxu0 0
    %2079 = vmatpush1.bf16.msra.mxu0 %v1449
    %2080 = vmatprep.subr.bf16.mxu0 0
    %2081 = vmatpush1.bf16.msra.mxu0 %v1448
    %2082 = vmatprep.subr.bf16.mxu0 0
    %2083 = vmatpush1.bf16.msra.mxu0 %v1447
    %2084 = vmatprep.subr.bf16.mxu0 0
    %2085 = vmatpush1.bf16.msra.mxu0 %v1446
    %2086 = vmatprep.subr.bf16.mxu0 0
    %2087 = vmatpush2.bf16.msra.mxu0 %v1461
    %2088 = vmatprep.subr.bf16.mxu0 0
    %2089 = vmatpush2.bf16.msra.mxu0 %v1460
    %2090 = vmatprep.subr.bf16.mxu0 0
    %2091 = vmatpush2.bf16.msra.mxu0 %v1459
    %2092 = vmatprep.subr.bf16.mxu0 0
    %2093 = vmatpush2.bf16.msra.mxu0 %v1458
    %2094 = vmatprep.subr.bf16.mxu0 0
    %2095 = vmatpush2.bf16.msra.mxu0 %v1457
    %2096 = vmatprep.subr.bf16.mxu0 0
    %2097 = vmatpush2.bf16.msra.mxu0 %v1456
    %2098 = vmatprep.subr.bf16.mxu0 0
    %2099 = vmatpush2.bf16.msra.mxu0 %v1455
    %2100 = vmatprep.subr.bf16.mxu0 0
    %2101 = vmatpush2.bf16.msra.mxu0 %v1454
    %2102 = vmatprep.mubr.bf16.mxu0 %v491
    %2103 = vmatmul.mubr.bf16.gmra.mxu0 %v490
    %v2104 = vpop.f32.mrf.mxu0
    %v2105 = vadd.f32 %v2065, %v2104
    %v2106 = vpop.f32.mrf.mxu0
    %v2107 = vpop.f32.mrf.mxu0
    %v2108 = vpop.f32.mrf.mxu0
    %2109 = vdwg.mxu0
    %2110 = vmatprep.subr.bf16.mxu0 0
    %2111 = vmatpush1.bf16.msra.mxu0 %v1469
    %2112 = vmatprep.subr.bf16.mxu0 0
    %2113 = vmatpush1.bf16.msra.mxu0 %v1468
    %2114 = vmatprep.subr.bf16.mxu0 0
    %2115 = vmatpush1.bf16.msra.mxu0 %v1467
    %2116 = vmatprep.subr.bf16.mxu0 0
    %2117 = vmatpush1.bf16.msra.mxu0 %v1466
    %2118 = vmatprep.subr.bf16.mxu0 0
    %2119 = vmatpush1.bf16.msra.mxu0 %v1465
    %2120 = vmatprep.subr.bf16.mxu0 0
    %2121 = vmatpush1.bf16.msra.mxu0 %v1464
    %2122 = vmatprep.subr.bf16.mxu0 0
    %2123 = vmatpush1.bf16.msra.mxu0 %v1463
    %2124 = vmatprep.subr.bf16.mxu0 0
    %2125 = vmatpush1.bf16.msra.mxu0 %v1462
    %2126 = vmatprep.subr.bf16.mxu0 0
    %2127 = vmatpush2.bf16.msra.mxu0 %v1477
    %2128 = vmatprep.subr.bf16.mxu0 0
    %2129 = vmatpush2.bf16.msra.mxu0 %v1476
    %2130 = vmatprep.subr.bf16.mxu0 0
    %2131 = vmatpush2.bf16.msra.mxu0 %v1475
    %2132 = vmatprep.subr.bf16.mxu0 0
    %2133 = vmatpush2.bf16.msra.mxu0 %v1474
    %2134 = vmatprep.subr.bf16.mxu0 0
    %2135 = vmatpush2.bf16.msra.mxu0 %v1473
    %2136 = vmatprep.subr.bf16.mxu0 0
    %2137 = vmatpush2.bf16.msra.mxu0 %v1472
    %2138 = vmatprep.subr.bf16.mxu0 0
    %2139 = vmatpush2.bf16.msra.mxu0 %v1471
    %2140 = vmatprep.subr.bf16.mxu0 0
    %2141 = vmatpush2.bf16.msra.mxu0 %v1470
    %2142 = vmatprep.mubr.bf16.mxu0 %v493
    %2143 = vmatmul.mubr.bf16.gmra.mxu0 %v492
    %v2144 = vpop.f32.mrf.mxu0
    %v2145 = vadd.f32 %v2105, %v2144
    %v2146 = vpop.f32.mrf.mxu0
    %v2147 = vpop.f32.mrf.mxu0
    %v2148 = vpop.f32.mrf.mxu0
    %2149 = vdwg.mxu0
    %v2150 = vmax.f32 %v2145, 0.0
    %v2151 = vpack.c.bf16 %v2150, %v2150
    %2152 = vst [vmem:[#allocation2] sm:$0xf] %v2151
    %2153 = vst [vmem:[#allocation3] sm:$0xff] 0.0
  $region33: #{expandable_fc_relu_cifar10.1} parent=0 // pred_fallthru
    _
  %v2154 = vld [vmem:[#allocation2] sm:$0xf]
  %v2155 = vld [vmem:[%s3] sm:$0xff]
  %v2156 = vld [vmem:[%s3 + $0x8] sm:$0xff]
  %v2157 = vld [vmem:[%s3 + $0x10] sm:$0xff]
  %v2158 = vld [vmem:[%s3 + $0x18] sm:$0xff]
  %v2159 = vld [vmem:[%s3 + $0x20] sm:$0xff]
  %v2160 = vld [vmem:[%s3 + $0x28] sm:$0xff]
  %v2161 = vld [vmem:[%s3 + $0x30] sm:$0xff]
  %v2162 = vld [vmem:[%s3 + $0x38] sm:$0xff]
  %v2163 = vld [vmem:[%s3 + $0x40] sm:$0xff]
  %v2164 = vld [vmem:[%s3 + $0x48] sm:$0xff]
  %v2165 = vld [vmem:[%s3 + $0x50] sm:$0xff]
  %v2166 = vld [vmem:[%s3 + $0x58] sm:$0xff]
  %v2167 = vld [vmem:[%s3 + $0x60] sm:$0xff]
  %v2168 = vld [vmem:[%s3 + $0x68] sm:$0xff]
  %v2169 = vld [vmem:[%s3 + $0x70] sm:$0xff]
  %v2170 = vld [vmem:[%s3 + $0x78] sm:$0xff]
  %v2171 = vld [vmem:[%s4] sm:$0x3]
  %v2173 = vlaneseq
  %v2174 = vshrl.u32 %v2173, 7
  %v2175 = vsub.s32 0, %v2174
  %v2176 = vrot.slane %v2171, %v2175
  %v2177 = vlaneseq
  %v2178 = vshrl.u32 %v2177, 7
  %v2179 = vsub.s32 1, %v2178
  %v2180 = vrot.slane %v2171, %v2179
  %v2199 = vunpack.c.l.b16 %v2155
  %v2200 = vunpack.c.h.b16 %v2155
  %v2201 = vunpack.c.l.b16 %v2156
  %v2202 = vunpack.c.h.b16 %v2156
  %v2203 = vunpack.c.l.b16 %v2157
  %v2204 = vunpack.c.h.b16 %v2157
  %v2205 = vunpack.c.l.b16 %v2158
  %v2206 = vunpack.c.h.b16 %v2158
  %v2207 = vunpack.c.l.b16 %v2159
  %v2208 = vunpack.c.h.b16 %v2159
  %v2209 = vunpack.c.l.b16 %v2160
  %v2210 = vunpack.c.h.b16 %v2160
  %v2211 = vunpack.c.l.b16 %v2161
  %v2212 = vunpack.c.h.b16 %v2161
  %v2213 = vunpack.c.l.b16 %v2162
  %v2214 = vunpack.c.h.b16 %v2162
  %v2215 = vunpack.c.l.b16 %v2163
  %v2216 = vunpack.c.h.b16 %v2163
  %v2217 = vunpack.c.l.b16 %v2164
  %v2218 = vunpack.c.h.b16 %v2164
  %v2219 = vunpack.c.l.b16 %v2165
  %v2220 = vunpack.c.h.b16 %v2165
  %v2221 = vunpack.c.l.b16 %v2166
  %v2222 = vunpack.c.h.b16 %v2166
  %v2223 = vunpack.c.l.b16 %v2167
  %v2224 = vunpack.c.h.b16 %v2167
  %v2225 = vunpack.c.l.b16 %v2168
  %v2226 = vunpack.c.h.b16 %v2168
  %v2227 = vunpack.c.l.b16 %v2169
  %v2228 = vunpack.c.h.b16 %v2169
  %v2229 = vunpack.c.l.b16 %v2170
  %v2230 = vunpack.c.h.b16 %v2170
  %v2231 = vpack.c.b16 %v2201, %v2199
  %v2232 = vpack.c.b16 %v2202, %v2200
  %v2233 = vpack.c.b16 %v2205, %v2203
  %v2234 = vpack.c.b16 %v2206, %v2204
  %v2235 = vpack.c.b16 %v2209, %v2207
  %v2236 = vpack.c.b16 %v2210, %v2208
  %v2237 = vpack.c.b16 %v2213, %v2211
  %v2238 = vpack.c.b16 %v2214, %v2212
  %v2239 = vpack.c.b16 %v2217, %v2215
  %v2240 = vpack.c.b16 %v2218, %v2216
  %v2241 = vpack.c.b16 %v2221, %v2219
  %v2242 = vpack.c.b16 %v2222, %v2220
  %v2243 = vpack.c.b16 %v2225, %v2223
  %v2244 = vpack.c.b16 %v2226, %v2224
  %v2245 = vpack.c.b16 %v2229, %v2227
  %v2246 = vpack.c.b16 %v2230, %v2228
  %2263 = vmatprep.subr.bf16.mxu0 %v2246
  %2264 = vmatpush1.bf16.msra.mxu0 %v2245
  %2265 = vmatprep.subr.bf16.mxu0 %v2244
  %2266 = vmatpush1.bf16.msra.mxu0 %v2243
  %2267 = vmatprep.subr.bf16.mxu0 %v2242
  %2268 = vmatpush1.bf16.msra.mxu0 %v2241
  %2269 = vmatprep.subr.bf16.mxu0 %v2240
  %2270 = vmatpush1.bf16.msra.mxu0 %v2239
  %2271 = vmatprep.subr.bf16.mxu0 %v2238
  %2272 = vmatpush1.bf16.msra.mxu0 %v2237
  %2273 = vmatprep.subr.bf16.mxu0 %v2236
  %2274 = vmatpush1.bf16.msra.mxu0 %v2235
  %2275 = vmatprep.subr.bf16.mxu0 %v2234
  %2276 = vmatpush1.bf16.msra.mxu0 %v2233
  %2277 = vmatprep.subr.bf16.mxu0 %v2232
  %2278 = vmatpush1.bf16.msra.mxu0 %v2231
  %2279 = vmatprep.subr.bf16.mxu0 0
  %2280 = vmatpush2.bf16.msra.mxu0 0
  %2281 = vmatprep.subr.bf16.mxu0 0
  %2282 = vmatpush2.bf16.msra.mxu0 0
  %2283 = vmatprep.subr.bf16.mxu0 0
  %2284 = vmatpush2.bf16.msra.mxu0 0
  %2285 = vmatprep.subr.bf16.mxu0 0
  %2286 = vmatpush2.bf16.msra.mxu0 0
  %2287 = vmatprep.subr.bf16.mxu0 0
  %2288 = vmatpush2.bf16.msra.mxu0 0
  %2289 = vmatprep.subr.bf16.mxu0 0
  %2290 = vmatpush2.bf16.msra.mxu0 0
  %2291 = vmatprep.subr.bf16.mxu0 0
  %2292 = vmatpush2.bf16.msra.mxu0 0
  %2293 = vmatprep.subr.bf16.mxu0 0
  %2294 = vmatpush2.bf16.msra.mxu0 0
  %2295 = vmatprep.mubr.bf16.mxu0 0
  %2296 = vmatmul.mubr.bf16.gmra.mxu0 %v2154
  %v2297 = vpop.f32.mrf.mxu0
  %v2298 = vadd.f32 %v2176, %v2297
  %v2299 = vpop.f32.mrf.mxu0
  %v2300 = vadd.f32 %v2180, %v2299
  %v2301 = vpop.f32.mrf.mxu0
  %v2302 = vpop.f32.mrf.mxu0
  %2303 = vdwg.mxu0
  %v2304 = vmax.f32 %v2298, 0.0
  %v2305 = vmax.f32 %v2300, 0.0
  %v2306 = vld [vmem:[#allocation3] sm:$0xff]
  %v2307 = vpack.c.bf16 %v2304, %v2304
  %v2308 = vpack.c.bf16 %v2305, %v2305
  %v2309 = vld [vmem:[%s5] sm:$0xf]
  %v2310 = vld [vmem:[%s5 + $0x4] sm:$0xf]
  %v2311 = vld [vmem:[%s5 + $0x8] sm:$0xf]
  %v2312 = vld [vmem:[%s5 + $0xc] sm:$0xf]
  %v2313 = vld [vmem:[%s5 + $0x10] sm:$0xf]
  %v2314 = vld [vmem:[%s5 + $0x14] sm:$0xf]
  %v2315 = vld [vmem:[%s5 + $0x18] sm:$0xf]
  %v2316 = vld [vmem:[%s5 + $0x1c] sm:$0xf]
  %v2317 = vld [vmem:[%s5 + $0x20] sm:$0xf]
  %v2318 = vld [vmem:[%s5 + $0x24] sm:$0xf]
  %v2319 = vld [vmem:[%s5 + $0x28] sm:$0xf]
  %v2320 = vld [vmem:[%s5 + $0x2c] sm:$0xf]
  %v2321 = vld [vmem:[%s5 + $0x30] sm:$0xf]
  %v2322 = vld [vmem:[%s5 + $0x34] sm:$0xf]
  %v2323 = vld [vmem:[%s5 + $0x38] sm:$0xf]
  %v2324 = vld [vmem:[%s5 + $0x3c] sm:$0xf]
  %v2325 = vld [vmem:[%s5 + $0x40] sm:$0xf]
  %v2326 = vld [vmem:[%s5 + $0x44] sm:$0xf]
  %v2327 = vld [vmem:[%s5 + $0x48] sm:$0xf]
  %v2328 = vld [vmem:[%s5 + $0x4c] sm:$0xf]
  %v2329 = vld [vmem:[%s5 + $0x50] sm:$0xf]
  %v2330 = vld [vmem:[%s5 + $0x54] sm:$0xf]
  %v2331 = vld [vmem:[%s5 + $0x58] sm:$0xf]
  %v2332 = vld [vmem:[%s5 + $0x5c] sm:$0xf]
  %v2333 = vld [vmem:[%s5 + $0x60] sm:$0xf]
  %v2334 = vld [vmem:[%s5 + $0x64] sm:$0xf]
  %v2335 = vld [vmem:[%s5 + $0x68] sm:$0xf]
  %v2336 = vld [vmem:[%s5 + $0x6c] sm:$0xf]
  %v2337 = vld [vmem:[%s5 + $0x70] sm:$0xf]
  %v2338 = vld [vmem:[%s5 + $0x74] sm:$0xf]
  %v2339 = vld [vmem:[%s5 + $0x78] sm:$0xf]
  %v2340 = vld [vmem:[%s5 + $0x7c] sm:$0xf]
  %v2373 = vunpack.c.l.b16 %v2309
  %v2374 = vunpack.c.l.b16 %v2310
  %v2375 = vunpack.c.l.b16 %v2311
  %v2376 = vunpack.c.l.b16 %v2312
  %v2377 = vunpack.c.l.b16 %v2313
  %v2378 = vunpack.c.l.b16 %v2314
  %v2379 = vunpack.c.l.b16 %v2315
  %v2380 = vunpack.c.l.b16 %v2316
  %v2381 = vunpack.c.l.b16 %v2317
  %v2382 = vunpack.c.l.b16 %v2318
  %v2383 = vunpack.c.l.b16 %v2319
  %v2384 = vunpack.c.l.b16 %v2320
  %v2385 = vunpack.c.l.b16 %v2321
  %v2386 = vunpack.c.l.b16 %v2322
  %v2387 = vunpack.c.l.b16 %v2323
  %v2388 = vunpack.c.l.b16 %v2324
  %v2389 = vunpack.c.l.b16 %v2325
  %v2390 = vunpack.c.l.b16 %v2326
  %v2391 = vunpack.c.l.b16 %v2327
  %v2392 = vunpack.c.l.b16 %v2328
  %v2393 = vunpack.c.l.b16 %v2329
  %v2394 = vunpack.c.l.b16 %v2330
  %v2395 = vunpack.c.l.b16 %v2331
  %v2396 = vunpack.c.l.b16 %v2332
  %v2397 = vunpack.c.l.b16 %v2333
  %v2398 = vunpack.c.l.b16 %v2334
  %v2399 = vunpack.c.l.b16 %v2335
  %v2400 = vunpack.c.l.b16 %v2336
  %v2401 = vunpack.c.l.b16 %v2337
  %v2402 = vunpack.c.l.b16 %v2338
  %v2403 = vunpack.c.l.b16 %v2339
  %v2404 = vunpack.c.l.b16 %v2340
  %v2405 = vpack.c.b16 %v2374, %v2373
  %v2406 = vpack.c.b16 %v2376, %v2375
  %v2407 = vpack.c.b16 %v2378, %v2377
  %v2408 = vpack.c.b16 %v2380, %v2379
  %v2409 = vpack.c.b16 %v2382, %v2381
  %v2410 = vpack.c.b16 %v2384, %v2383
  %v2411 = vpack.c.b16 %v2386, %v2385
  %v2412 = vpack.c.b16 %v2388, %v2387
  %v2413 = vpack.c.b16 %v2390, %v2389
  %v2414 = vpack.c.b16 %v2392, %v2391
  %v2415 = vpack.c.b16 %v2394, %v2393
  %v2416 = vpack.c.b16 %v2396, %v2395
  %v2417 = vpack.c.b16 %v2398, %v2397
  %v2418 = vpack.c.b16 %v2400, %v2399
  %v2419 = vpack.c.b16 %v2402, %v2401
  %v2420 = vpack.c.b16 %v2404, %v2403
  %2437 = vmatprep.subr.bf16.mxu0 0
  %2438 = vmatpush1.bf16.msra.mxu0 %v2412
  %2439 = vmatprep.subr.bf16.mxu0 0
  %2440 = vmatpush1.bf16.msra.mxu0 %v2411
  %2441 = vmatprep.subr.bf16.mxu0 0
  %2442 = vmatpush1.bf16.msra.mxu0 %v2410
  %2443 = vmatprep.subr.bf16.mxu0 0
  %2444 = vmatpush1.bf16.msra.mxu0 %v2409
  %2445 = vmatprep.subr.bf16.mxu0 0
  %2446 = vmatpush1.bf16.msra.mxu0 %v2408
  %2447 = vmatprep.subr.bf16.mxu0 0
  %2448 = vmatpush1.bf16.msra.mxu0 %v2407
  %2449 = vmatprep.subr.bf16.mxu0 0
  %2450 = vmatpush1.bf16.msra.mxu0 %v2406
  %2451 = vmatprep.subr.bf16.mxu0 0
  %2452 = vmatpush1.bf16.msra.mxu0 %v2405
  %2453 = vmatprep.subr.bf16.mxu0 0
  %2454 = vmatpush2.bf16.msra.mxu0 %v2420
  %2455 = vmatprep.subr.bf16.mxu0 0
  %2456 = vmatpush2.bf16.msra.mxu0 %v2419
  %2457 = vmatprep.subr.bf16.mxu0 0
  %2458 = vmatpush2.bf16.msra.mxu0 %v2418
  %2459 = vmatprep.subr.bf16.mxu0 0
  %2460 = vmatpush2.bf16.msra.mxu0 %v2417
  %2461 = vmatprep.subr.bf16.mxu0 0
  %2462 = vmatpush2.bf16.msra.mxu0 %v2416
  %2463 = vmatprep.subr.bf16.mxu0 0
  %2464 = vmatpush2.bf16.msra.mxu0 %v2415
  %2465 = vmatprep.subr.bf16.mxu0 0
  %2466 = vmatpush2.bf16.msra.mxu0 %v2414
  %2467 = vmatprep.subr.bf16.mxu0 0
  %2468 = vmatpush2.bf16.msra.mxu0 %v2413
  %2469 = vmatprep.mubr.bf16.mxu0 %v2308
  %2470 = vmatmul.mubr.bf16.gmra.mxu0 %v2307
  %v2471 = vpop.f32.mrf.mxu0
  %v2472 = vadd.f32 0.0, %v2471
  %v2473 = vpop.f32.mrf.mxu0
  %v2474 = vpop.f32.mrf.mxu0
  %v2475 = vpop.f32.mrf.mxu0
  %2476 = vdwg.mxu0
  %v2477 = vadd.f32 %v2306, %v2472
  %2478 = vst [vmem:[#allocation3] sm:$0xff] %v2477
  // Predicated region
  $region34: #{expandable_fc_relu_cifar10.1} parent=0 // pred_check
    %p2479 = pneg %p27
  $region35: #{expandable_fc_relu_cifar10.1} parent=0 // pred_check_branch
    %2481 = sbr.rel (%p2479) target = $region37
  $region36: #{expandable_fc_relu_cifar10.1} parent=0 // pred_region
    %v2482 = vld [vmem:[#allocation3] sm:$0xff]
    %v2483 = vld [vmem:[%s6] sm:$0x1]
    %v2485 = vlaneseq
    %v2486 = vshrl.u32 %v2485, 7
    %v2487 = vsub.s32 0, %v2486
    %v2488 = vrot.slane %v2483, %v2487
    %v2490 = vadd.f32 %v2482, %v2488
    %2491 = vst [vmem:[%s7] sm:$0xff] %v2490
  $region37: #{expandable_fc_relu_cifar10.1} parent=0 // pred_fallthru
    _
  // Predicated region
  $region38: #{expandable_fc_relu_cifar10.1} parent=0 // pred_check
    _
  $region39: #{expandable_fc_relu_cifar10.1} parent=0 // pred_check_branch
    %2493 = sbr.rel (0) target = $region41
  $region40: #{expandable_fc_relu_cifar10.1} parent=0 // pred_region
    _
  $region41: #{expandable_fc_relu_cifar10.1} parent=0 // pred_fallthru
    _
  // Predicated region
  $region42: #{expandable_fc_relu_cifar10.1} parent=0 // pred_check
    _
  $region43: #{expandable_fc_relu_cifar10.1} parent=0 // pred_check_branch
    %2495 = sbr.rel (0) target = $region45
  $region44: #{expandable_fc_relu_cifar10.1} parent=0 // pred_region
    _
  $region45: #{expandable_fc_relu_cifar10.1} parent=0 // pred_fallthru
    _

</llo_original>
